<compile_context>
chip_gen: v6e
topology: v6e:2x2x1
jax: 0.10.0
libtpu: 0.0.40
codegen_flags: <defaults>
</compile_context>

<pallas_src>
import numpy as np
import jax
import jax.numpy as jnp
from jax import lax
from jax.experimental import pallas as pl


# --------------------------- fused multi-layer LSTM ---------------------------
def _make_encoder_kernel(n_layers, T, B, H, V):
    """Single-invocation kernel (no grid): everything resident in VMEM / vregs.

    Ref layout (kernel args, in order):
      src_ref  : (T*B, 1) int32   token ids, time-major rows
      len_ref  : (B, 1)   int32   sequence lengths
      femb_ref : (V, 4H)  f32     prefolded (emb_table @ W_ih0^T) * gate_scale
      b0_ref   : (1, 4H)  f32     (b_ih0 + b_hh0) * gate_scale
      whh0_ref : (H, 4H)  f32     W_hh0^T * gate_scale
      per layer l>=1:  wstk_l (2H, 4H) = [W_ih^T; W_hh^T]*scale ; b_l (1, 4H)*scale
      out_ref  : (B, T*H) f32     top-layer outputs, lane-dense store
      h_out    : (L, B, H) f32    final hidden state per layer
      c_out    : (L, B, H) f32    final cell state per layer
    """
    L = n_layers

    def kernel(*refs):
        src_ref, len_ref, femb_ref, b0_ref, whh0_ref = refs[:5]
        layer_refs = refs[5:5 + 2 * (L - 1)]
        out_ref, h_out_ref, c_out_ref = refs[5 + 2 * (L - 1):]

        lengths = len_ref[...]                                        # (B, 1) int32
        # Lane-group selector over the fused (B,4H)=(8,128) gate vector:
        # lanes [2H,3H) are the g gate (plain tanh); i/f/o use the tanh-sigmoid.
        col = lax.broadcasted_iota(jnp.int32, (B, 4 * H), 1)
        tanh_lane = (col >= 2 * H) & (col < 3 * H)

        # ---- Embedding + layer-0 input projection fused into ONE hoisted matmul.
        # The one-hot matmul is an exact row selection of the prefolded table.
        src_vals = src_ref[...]                                       # (T*B, 1)
        vcol = lax.broadcasted_iota(jnp.int32, (T * B, V), 1)
        onehot = (vcol == src_vals).astype(jnp.float32)               # (T*B, V)
        xp0 = jnp.dot(onehot, femb_ref[...],
                      preferred_element_type=jnp.float32) + b0_ref[...]   # (T*B, 4H)
        # Per-step slabs kept as register values: (B,4H)=(8,128) f32 = 1 vreg each.
        xp0_t = [xp0[t * B:(t + 1) * B, :] for t in range(T)]

        # Hoist all loop-invariant weights out of the recurrence (vreg-resident).
        whh0 = whh0_ref[...]                                          # (H, 4H)
        wstk = [layer_refs[2 * i][...] for i in range(L - 1)]         # (2H, 4H)
        bstk = [layer_refs[2 * i + 1][...] for i in range(L - 1)]     # (1, 4H)

        h = [jnp.zeros((B, H), jnp.float32) for _ in range(L)]
        c = [jnp.zeros((B, H), jnp.float32) for _ in range(L)]
        layer_out = [None] * L          # each layer's most recent (masked) output
        top_out = [None] * T

        def lstm_cell(gates, h_prev, c_prev, t):
            # ONE transcendental per step over all 128 lanes: i/f/o columns were
            # pre-scaled by 0.5 so sigmoid(x) = 0.5*tanh(x/2) + 0.5.
            th = jnp.tanh(gates)
            acts = jnp.where(tanh_lane, th, 0.5 * th + 0.5)
            i_g = acts[:, 0 * H:1 * H]
            f_g = acts[:, 1 * H:2 * H]
            g_g = acts[:, 2 * H:3 * H]
            o_g = acts[:, 3 * H:4 * H]
            c_new = f_g * c_prev + i_g * g_g
            h_new = o_g * jnp.tanh(c_new)
            # pack_padded_sequence: freeze state at t >= len[b];
            # pad_packed_sequence: zero outputs past each length.
            mask = lengths > t
            return (jnp.where(mask, h_new, h_prev),
                    jnp.where(mask, c_new, c_prev),
                    jnp.where(mask, h_new, jnp.zeros_like(h_new)))

        # ---- Wavefront schedule (fully unrolled; T and L are static).
        # At diagonal d, layer l runs its timestep t = d - l: serial chain drops
        # from L*T dependent matmuls to T+L-1, and matmuls of different layers on
        # the same diagonal are independent so the scheduler can pipeline them.
        for d in range(T + L - 1):
            produced = {}
            for l in range(L):
                t = d - l
                if not (0 <= t < T):
                    continue
                if l == 0:
                    gates = xp0_t[t]
                    if t > 0:          # h[0] == 0 at t == 0 -> matmul would be 0
                        gates = gates + jnp.dot(
                            h[0], whh0, preferred_element_type=jnp.float32)
                else:
                    # Input projection + recurrence fused: one (B,2H)x(2H,4H) matmul.
                    lhs = jnp.concatenate([layer_out[l - 1], h[l]], axis=1)
                    gates = jnp.dot(lhs, wstk[l - 1],
                                    preferred_element_type=jnp.float32) + bstk[l - 1]
                h[l], c[l], o_masked = lstm_cell(gates, h[l], c[l], t)
                produced[l] = o_masked
                if l == L - 1:
                    top_out[t] = o_masked
            # Commit after the diagonal so layer l reads layer l-1's PREVIOUS step.
            for l, v in produced.items():
                layer_out[l] = v

        # Single lane-dense (B, T*H) = (8,256) unmasked store for the outputs;
        # the wrapper reshape to (B,T,H) is a free metadata op.
        out_ref[...] = jnp.concatenate(top_out, axis=1)
        for l in range(L):              # final states written once per layer
            h_out_ref[l] = h[l]
            c_out_ref[l] = c[l]

    return kernel


# ------------------------- one-time parameter preprocessing -------------------
def prepare_encoder_params(emb_table, lstm_params):
    """Hoisted out of the per-call path (call once at setup):
       * fold the embedding table into layer-0's input projection (emb @ W_ih0^T),
       * transpose weights to (in, 4H) and fuse b_ih + b_hh,
       * pre-scale i/f/o gate columns by 0.5 (sigmoid(x) = 0.5*tanh(x/2) + 0.5),
       * stack [W_ih^T; W_hh^T] for layers >= 1 (one matmul per recurrent step)."""
    H = np.asarray(lstm_params[0][1]).shape[1]
    scale = np.ones((1, 4 * H), np.float32)
    scale[:, 0:2 * H] = 0.5
    scale[:, 3 * H:4 * H] = 0.5

    w_ih0, w_hh0, b_ih0, b_hh0 = [np.asarray(a, np.float32) for a in lstm_params[0]]
    emb = np.asarray(emb_table, np.float32)
    femb = (emb @ w_ih0.T) * scale                                   # (V, 4H)
    b0 = (b_ih0 + b_hh0).reshape(1, 4 * H) * scale                   # (1, 4H)
    whh0 = w_hh0.T * scale                                           # (H, 4H)

    extra = []
    for layer in lstm_params[1:]:
        w_ih, w_hh, b_ih, b_hh = [np.asarray(a, np.float32) for a in layer]
        extra.append(jnp.asarray(np.concatenate([w_ih.T, w_hh.T], axis=0) * scale))
        extra.append(jnp.asarray((b_ih + b_hh).reshape(1, 4 * H) * scale))
    return (jnp.asarray(femb), jnp.asarray(b0), jnp.asarray(whh0), tuple(extra))


# ------------------------------- Encoder wrapper ------------------------------
def encoder_forward(src, src_len, prepared):
    """src: (B, T) int32 token ids (batch_first); src_len: (B,) int32.
    Returns (outputs (B, T, H), hidden (L, B, H), cell (L, B, H))."""
    femb, b0, whh0, extra = prepared
    B, T = src.shape
    V = femb.shape[0]
    H = whh0.shape[0]
    n_layers = 1 + len(extra) // 2

    # TODO(synk): nn.Dropout / inter-layer LSTM dropout are identity at inference;
    # training-mode dropout is not implemented.
    src_flat = jnp.transpose(src).reshape(T * B, 1).astype(jnp.int32)  # time-major rows
    len2d = src_len.reshape(B, 1).astype(jnp.int32)

    out_flat, h_fin, c_fin = pl.pallas_call(
        _make_encoder_kernel(n_layers, T, B, H, V),
        out_shape=(
            jax.ShapeDtypeStruct((B, T * H), jnp.float32),
            jax.ShapeDtypeStruct((n_layers, B, H), jnp.float32),
            jax.ShapeDtypeStruct((n_layers, B, H), jnp.float32),
        ),
        # Single invocation, no grid / BlockSpecs / scratch: total working set is
        # ~100 KB (trivially fits VMEM on v5e/v6e/v7x); the kernel is latency-bound.
    )(src_flat, len2d, femb, b0, whh0, *extra)

    outputs = out_flat.reshape(B, T, H)        # free metadata reshape, batch_first
    return outputs, h_fin, c_fin


# ------------------------------ pure-JAX reference ----------------------------
def _encoder_reference(src, src_len, emb_table, lstm_params):
    x = jnp.take(emb_table, src, axis=0).astype(jnp.float32)
    x = jnp.transpose(x, (1, 0, 2))                   # (T, B, E)
    T, B, _ = x.shape
    hs, cs = [], []
    layer_in = x
    for (w_ih, w_hh, b_ih, b_hh) in lstm_params:
        H = w_hh.shape[1]

        def step(carry, inp, w_ih=w_ih, w_hh=w_hh, b_ih=b_ih, b_hh=b_hh):
            h, c = carry
            x_t, t = inp
            gates = x_t @ w_ih.T + h @ w_hh.T + b_ih + b_hh
            i, f, g, o = jnp.split(gates, 4, axis=-1)
            i, f, o = jax.nn.sigmoid(i), jax.nn.sigmoid(f), jax.nn.sigmoid(o)
            g = jnp.tanh(g)
            c_new = f * c + i * g
            h_new = o * jnp.tanh(c_new)
            mask = (t < src_len)[:, None]
            h2 = jnp.where(mask, h_new, h)
            c2 = jnp.where(mask, c_new, c)
            out = jnp.where(mask, h_new, 0.0)
            return (h2, c2), out

        init = (jnp.zeros((B, H), jnp.float32), jnp.zeros((B, H), jnp.float32))
        (hT, cT), outs = jax.lax.scan(step, init, (layer_in, jnp.arange(T)))
        hs.append(hT)
        cs.append(cT)
        layer_in = outs
    return jnp.transpose(layer_in, (1, 0, 2)), jnp.stack(hs), jnp.stack(cs)


# ------------------------------------ main ------------------------------------
if __name__ == "__main__":
    # Module hyper-parameters (small, consistent with Encoder.__init__).
    INPUT_DIM = 50      # vocab size
    EMB_DIM = 32
    HIDDEN_DIM = 32
    N_LAYERS = 2
    # dropout=0.1 in __init__, identity at inference.

    B, T = 8, 8

    key = jax.random.PRNGKey(0)
    k_emb, k_src, *k_params = jax.random.split(key, 2 + 4 * N_LAYERS)

    # Deterministic parameter init (PyTorch-style: Embedding ~ N(0,1),
    # LSTM weights/biases ~ U(-1/sqrt(H), 1/sqrt(H))).
    emb_table = jax.random.normal(k_emb, (INPUT_DIM, EMB_DIM), jnp.float32)
    stdv = 1.0 / np.sqrt(HIDDEN_DIM)
    lstm_params = []
    for l in range(N_LAYERS):
        in_dim = EMB_DIM if l == 0 else HIDDEN_DIM
        kw = k_params[4 * l: 4 * l + 4]
        w_ih = jax.random.uniform(kw[0], (4 * HIDDEN_DIM, in_dim), jnp.float32, -stdv, stdv)
        w_hh = jax.random.uniform(kw[1], (4 * HIDDEN_DIM, HIDDEN_DIM), jnp.float32, -stdv, stdv)
        b_ih = jax.random.uniform(kw[2], (4 * HIDDEN_DIM,), jnp.float32, -stdv, stdv)
        b_hh = jax.random.uniform(kw[3], (4 * HIDDEN_DIM,), jnp.float32, -stdv, stdv)
        lstm_params.append((w_ih, w_hh, b_ih, b_hh))

    src = jax.random.randint(k_src, (B, T), 0, INPUT_DIM, dtype=jnp.int32)
    src_len_np = np.array([8, 5, 3, 8, 2, 7, 6, 4], dtype=np.int32)   # variable lengths
    src_len = jnp.asarray(src_len_np)

    # One-time parameter preprocessing (outside the per-call / jitted path).
    prepared = prepare_encoder_params(emb_table, lstm_params)

    fwd = jax.jit(encoder_forward)
    outputs, hidden, cell = fwd(src, src_len, prepared)
    outputs = jax.block_until_ready(outputs)
    hidden = jax.block_until_ready(hidden)
    cell = jax.block_until_ready(cell)

    # pad_packed_sequence pads to max(src_len) (here == T; slice for exactness).
    max_len = int(src_len_np.max())
    outputs = outputs[:, :max_len]

    # Correctness check against a pure-JAX reference of the original math.
    # Tolerance slightly looser than before: the sigmoid-via-tanh rewrite and the
    # prefolded emb @ W_ih0^T reorder floating-point ops (mathematically exact).
    ref_out, ref_h, ref_c = _encoder_reference(src, src_len, emb_table, lstm_params)
    ref_out = ref_out[:, :max_len]
    assert np.allclose(np.asarray(outputs), np.asarray(ref_out), atol=1e-4, rtol=2e-4)
    assert np.allclose(np.asarray(hidden), np.asarray(ref_h), atol=1e-4, rtol=2e-4)
    assert np.allclose(np.asarray(cell), np.asarray(ref_c), atol=1e-4, rtol=2e-4)

    assert outputs.shape == (B, max_len, HIDDEN_DIM)
    assert hidden.shape == (N_LAYERS, B, HIDDEN_DIM)
    assert cell.shape == (N_LAYERS, B, HIDDEN_DIM)
    print("KERNEL_OK")
</pallas_src>

<mosaic_0001>
module attributes {stable_mosaic.version = 11 : i64} {
  func.func @kernel(%arg0: memref<64x1xi32, #tpu.memory_space<vmem>>, %arg1: memref<8x1xi32, #tpu.memory_space<vmem>>, %arg2: memref<50x128xf32, #tpu.memory_space<vmem>>, %arg3: memref<1x128xf32, #tpu.memory_space<vmem>>, %arg4: memref<32x128xf32, #tpu.memory_space<vmem>>, %arg5: memref<64x128xf32, #tpu.memory_space<vmem>>, %arg6: memref<1x128xf32, #tpu.memory_space<vmem>>, %arg7: memref<8x256xf32, #tpu.memory_space<vmem>>, %arg8: memref<2x8x32xf32, #tpu.memory_space<vmem>>, %arg9: memref<2x8x32xf32, #tpu.memory_space<vmem>>) attributes {dimension_semantics = [], scalar_prefetch = 0 : i64, scratch_operands = 0 : i64, tpu.core_type = #tpu.core_type<tc>} {
    %c0 = arith.constant 0 : index
    %c0_0 = arith.constant 0 : index
    %0 = vector.load %arg1[%c0, %c0_0] : memref<8x1xi32, #tpu.memory_space<vmem>>, vector<8x1xi32>
    %1 = tpu.iota {dimensions = array<i32: 1>} : vector<8x128xi32>
    %c64_i32 = arith.constant 64 : i32
    %2 = vector.broadcast %c64_i32 : i32 to vector<8x128xi32>
    %3 = arith.cmpi sge, %1, %2 : vector<8x128xi32>
    %c96_i32 = arith.constant 96 : i32
    %4 = vector.broadcast %c96_i32 : i32 to vector<8x128xi32>
    %5 = arith.cmpi slt, %1, %4 : vector<8x128xi32>
    %6 = arith.andi %3, %5 : vector<8x128xi1>
    %c0_1 = arith.constant 0 : index
    %c0_2 = arith.constant 0 : index
    %7 = vector.load %arg0[%c0_1, %c0_2] : memref<64x1xi32, #tpu.memory_space<vmem>>, vector<64x1xi32>
    %8 = tpu.iota {dimensions = array<i32: 1>} : vector<64x50xi32>
    %9 = vector.broadcast %7 : vector<64x1xi32> to vector<64x50xi32>
    %10 = arith.cmpi eq, %8, %9 : vector<64x50xi32>
    %11 = arith.extui %10 : vector<64x50xi1> to vector<64x50xi32>
    %12 = arith.sitofp %11 : vector<64x50xi32> to vector<64x50xf32>
    %c0_3 = arith.constant 0 : index
    %c0_4 = arith.constant 0 : index
    %13 = vector.load %arg2[%c0_3, %c0_4] : memref<50x128xf32, #tpu.memory_space<vmem>>, vector<50x128xf32>
    %cst = arith.constant dense<0.000000e+00> : vector<64x128xf32>
    %14 = tpu.matmul %12, %13, %cst {dimension_numbers = #tpu.dot_dimension_numbers<[1], [0], [0], [1], [0, 0, 1, 1], [], []>} : vector<64x50xf32>, vector<50x128xf32>, vector<64x128xf32> -> vector<64x128xf32>
    %c0_5 = arith.constant 0 : index
    %c0_6 = arith.constant 0 : index
    %15 = vector.load %arg3[%c0_5, %c0_6] : memref<1x128xf32, #tpu.memory_space<vmem>>, vector<1x128xf32>
    %16 = vector.broadcast %15 : vector<1x128xf32> to vector<64x128xf32>
    %17 = arith.addf %14, %16 : vector<64x128xf32>
    %18 = vector.extract_strided_slice %17 {offsets = [0, 0], sizes = [8, 128], strides = [1, 1]} : vector<64x128xf32> to vector<8x128xf32>
    %19 = vector.extract_strided_slice %17 {offsets = [8, 0], sizes = [8, 128], strides = [1, 1]} : vector<64x128xf32> to vector<8x128xf32>
    %20 = vector.extract_strided_slice %17 {offsets = [16, 0], sizes = [8, 128], strides = [1, 1]} : vector<64x128xf32> to vector<8x128xf32>
    %21 = vector.extract_strided_slice %17 {offsets = [24, 0], sizes = [8, 128], strides = [1, 1]} : vector<64x128xf32> to vector<8x128xf32>
    %22 = vector.extract_strided_slice %17 {offsets = [32, 0], sizes = [8, 128], strides = [1, 1]} : vector<64x128xf32> to vector<8x128xf32>
    %23 = vector.extract_strided_slice %17 {offsets = [40, 0], sizes = [8, 128], strides = [1, 1]} : vector<64x128xf32> to vector<8x128xf32>
    %24 = vector.extract_strided_slice %17 {offsets = [48, 0], sizes = [8, 128], strides = [1, 1]} : vector<64x128xf32> to vector<8x128xf32>
    %25 = vector.extract_strided_slice %17 {offsets = [56, 0], sizes = [8, 128], strides = [1, 1]} : vector<64x128xf32> to vector<8x128xf32>
    %c0_7 = arith.constant 0 : index
    %c0_8 = arith.constant 0 : index
    %26 = vector.load %arg4[%c0_7, %c0_8] : memref<32x128xf32, #tpu.memory_space<vmem>>, vector<32x128xf32>
    %c0_9 = arith.constant 0 : index
    %c0_10 = arith.constant 0 : index
    %27 = vector.load %arg5[%c0_9, %c0_10] : memref<64x128xf32, #tpu.memory_space<vmem>>, vector<64x128xf32>
    %c0_11 = arith.constant 0 : index
    %c0_12 = arith.constant 0 : index
    %28 = vector.load %arg6[%c0_11, %c0_12] : memref<1x128xf32, #tpu.memory_space<vmem>>, vector<1x128xf32>
    %cst_13 = arith.constant 0.000000e+00 : f32
    %29 = vector.broadcast %cst_13 : f32 to vector<8x32xf32>
    %cst_14 = arith.constant 0.000000e+00 : f32
    %30 = vector.broadcast %cst_14 : f32 to vector<8x32xf32>
    %cst_15 = arith.constant 0.000000e+00 : f32
    %31 = vector.broadcast %cst_15 : f32 to vector<8x32xf32>
    %cst_16 = arith.constant 0.000000e+00 : f32
    %32 = vector.broadcast %cst_16 : f32 to vector<8x32xf32>
    %33 = math.tanh %18 : vector<8x128xf32>
    %cst_17 = arith.constant 5.000000e-01 : f32
    %34 = vector.broadcast %cst_17 : f32 to vector<8x128xf32>
    %35 = arith.mulf %34, %33 : vector<8x128xf32>
    %cst_18 = arith.constant 5.000000e-01 : f32
    %36 = vector.broadcast %cst_18 : f32 to vector<8x128xf32>
    %37 = arith.addf %35, %36 : vector<8x128xf32>
    %38 = arith.select %6, %33, %37 : vector<8x128xi1>, vector<8x128xf32>
    %39 = vector.extract_strided_slice %38 {offsets = [0, 0], sizes = [8, 32], strides = [1, 1]} : vector<8x128xf32> to vector<8x32xf32>
    %40 = vector.extract_strided_slice %38 {offsets = [0, 32], sizes = [8, 32], strides = [1, 1]} : vector<8x128xf32> to vector<8x32xf32>
    %41 = vector.extract_strided_slice %38 {offsets = [0, 64], sizes = [8, 32], strides = [1, 1]} : vector<8x128xf32> to vector<8x32xf32>
    %42 = vector.extract_strided_slice %38 {offsets = [0, 96], sizes = [8, 32], strides = [1, 1]} : vector<8x128xf32> to vector<8x32xf32>
    %43 = arith.mulf %40, %31 : vector<8x32xf32>
    %44 = arith.mulf %39, %41 : vector<8x32xf32>
    %45 = arith.addf %43, %44 : vector<8x32xf32>
    %46 = math.tanh %45 : vector<8x32xf32>
    %47 = arith.mulf %42, %46 : vector<8x32xf32>
    %c0_i32 = arith.constant 0 : i32
    %48 = vector.broadcast %c0_i32 : i32 to vector<8x1xi32>
    %49 = arith.cmpi sgt, %0, %48 : vector<8x1xi32>
    %50 = vector.shape_cast %49 : vector<8x1xi1> to vector<8x1xi1>
    %51 = vector.broadcast %50 : vector<8x1xi1> to vector<8x32xi1>
    %52 = arith.select %51, %47, %29 : vector<8x32xi1>, vector<8x32xf32>
    %53 = vector.shape_cast %49 : vector<8x1xi1> to vector<8x1xi1>
    %54 = vector.broadcast %53 : vector<8x1xi1> to vector<8x32xi1>
    %55 = arith.select %54, %45, %31 : vector<8x32xi1>, vector<8x32xf32>
    %cst_19 = arith.constant 0.000000e+00 : f32
    %56 = vector.broadcast %cst_19 : f32 to vector<8x32xf32>
    %57 = vector.shape_cast %49 : vector<8x1xi1> to vector<8x1xi1>
    %58 = vector.broadcast %57 : vector<8x1xi1> to vector<8x32xi1>
    %59 = arith.select %58, %47, %56 : vector<8x32xi1>, vector<8x32xf32>
    %cst_20 = arith.constant dense<0.000000e+00> : vector<8x128xf32>
    %60 = tpu.matmul %52, %26, %cst_20 {dimension_numbers = #tpu.dot_dimension_numbers<[1], [0], [0], [1], [0, 0, 1, 1], [], []>} : vector<8x32xf32>, vector<32x128xf32>, vector<8x128xf32> -> vector<8x128xf32>
    %61 = arith.addf %19, %60 : vector<8x128xf32>
    %62 = math.tanh %61 : vector<8x128xf32>
    %cst_21 = arith.constant 5.000000e-01 : f32
    %63 = vector.broadcast %cst_21 : f32 to vector<8x128xf32>
    %64 = arith.mulf %63, %62 : vector<8x128xf32>
    %cst_22 = arith.constant 5.000000e-01 : f32
    %65 = vector.broadcast %cst_22 : f32 to vector<8x128xf32>
    %66 = arith.addf %64, %65 : vector<8x128xf32>
    %67 = arith.select %6, %62, %66 : vector<8x128xi1>, vector<8x128xf32>
    %68 = vector.extract_strided_slice %67 {offsets = [0, 0], sizes = [8, 32], strides = [1, 1]} : vector<8x128xf32> to vector<8x32xf32>
    %69 = vector.extract_strided_slice %67 {offsets = [0, 32], sizes = [8, 32], strides = [1, 1]} : vector<8x128xf32> to vector<8x32xf32>
    %70 = vector.extract_strided_slice %67 {offsets = [0, 64], sizes = [8, 32], strides = [1, 1]} : vector<8x128xf32> to vector<8x32xf32>
    %71 = vector.extract_strided_slice %67 {offsets = [0, 96], sizes = [8, 32], strides = [1, 1]} : vector<8x128xf32> to vector<8x32xf32>
    %72 = arith.mulf %69, %55 : vector<8x32xf32>
    %73 = arith.mulf %68, %70 : vector<8x32xf32>
    %74 = arith.addf %72, %73 : vector<8x32xf32>
    %75 = math.tanh %74 : vector<8x32xf32>
    %76 = arith.mulf %71, %75 : vector<8x32xf32>
    %c1_i32 = arith.constant 1 : i32
    %77 = vector.broadcast %c1_i32 : i32 to vector<8x1xi32>
    %78 = arith.cmpi sgt, %0, %77 : vector<8x1xi32>
    %79 = vector.shape_cast %78 : vector<8x1xi1> to vector<8x1xi1>
    %80 = vector.broadcast %79 : vector<8x1xi1> to vector<8x32xi1>
    %81 = arith.select %80, %76, %52 : vector<8x32xi1>, vector<8x32xf32>
    %82 = vector.shape_cast %78 : vector<8x1xi1> to vector<8x1xi1>
    %83 = vector.broadcast %82 : vector<8x1xi1> to vector<8x32xi1>
    %84 = arith.select %83, %74, %55 : vector<8x32xi1>, vector<8x32xf32>
    %cst_23 = arith.constant 0.000000e+00 : f32
    %85 = vector.broadcast %cst_23 : f32 to vector<8x32xf32>
    %86 = vector.shape_cast %78 : vector<8x1xi1> to vector<8x1xi1>
    %87 = vector.broadcast %86 : vector<8x1xi1> to vector<8x32xi1>
    %88 = arith.select %87, %76, %85 : vector<8x32xi1>, vector<8x32xf32>
    %89 = tpu.concatenate %59, %30 in 1 : vector<8x32xf32>, vector<8x32xf32> -> vector<8x64xf32>
    %cst_24 = arith.constant dense<0.000000e+00> : vector<8x128xf32>
    %90 = tpu.matmul %89, %27, %cst_24 {dimension_numbers = #tpu.dot_dimension_numbers<[1], [0], [0], [1], [0, 0, 1, 1], [], []>} : vector<8x64xf32>, vector<64x128xf32>, vector<8x128xf32> -> vector<8x128xf32>
    %91 = vector.broadcast %28 : vector<1x128xf32> to vector<8x128xf32>
    %92 = arith.addf %90, %91 : vector<8x128xf32>
    %93 = math.tanh %92 : vector<8x128xf32>
    %cst_25 = arith.constant 5.000000e-01 : f32
    %94 = vector.broadcast %cst_25 : f32 to vector<8x128xf32>
    %95 = arith.mulf %94, %93 : vector<8x128xf32>
    %cst_26 = arith.constant 5.000000e-01 : f32
    %96 = vector.broadcast %cst_26 : f32 to vector<8x128xf32>
    %97 = arith.addf %95, %96 : vector<8x128xf32>
    %98 = arith.select %6, %93, %97 : vector<8x128xi1>, vector<8x128xf32>
    %99 = vector.extract_strided_slice %98 {offsets = [0, 0], sizes = [8, 32], strides = [1, 1]} : vector<8x128xf32> to vector<8x32xf32>
    %100 = vector.extract_strided_slice %98 {offsets = [0, 32], sizes = [8, 32], strides = [1, 1]} : vector<8x128xf32> to vector<8x32xf32>
    %101 = vector.extract_strided_slice %98 {offsets = [0, 64], sizes = [8, 32], strides = [1, 1]} : vector<8x128xf32> to vector<8x32xf32>
    %102 = vector.extract_strided_slice %98 {offsets = [0, 96], sizes = [8, 32], strides = [1, 1]} : vector<8x128xf32> to vector<8x32xf32>
    %103 = arith.mulf %100, %32 : vector<8x32xf32>
    %104 = arith.mulf %99, %101 : vector<8x32xf32>
    %105 = arith.addf %103, %104 : vector<8x32xf32>
    %106 = math.tanh %105 : vector<8x32xf32>
    %107 = arith.mulf %102, %106 : vector<8x32xf32>
    %c0_i32_27 = arith.constant 0 : i32
    %108 = vector.broadcast %c0_i32_27 : i32 to vector<8x1xi32>
    %109 = arith.cmpi sgt, %0, %108 : vector<8x1xi32>
    %110 = vector.shape_cast %109 : vector<8x1xi1> to vector<8x1xi1>
    %111 = vector.broadcast %110 : vector<8x1xi1> to vector<8x32xi1>
    %112 = arith.select %111, %107, %30 : vector<8x32xi1>, vector<8x32xf32>
    %113 = vector.shape_cast %109 : vector<8x1xi1> to vector<8x1xi1>
    %114 = vector.broadcast %113 : vector<8x1xi1> to vector<8x32xi1>
    %115 = arith.select %114, %105, %32 : vector<8x32xi1>, vector<8x32xf32>
    %cst_28 = arith.constant 0.000000e+00 : f32
    %116 = vector.broadcast %cst_28 : f32 to vector<8x32xf32>
    %117 = vector.shape_cast %109 : vector<8x1xi1> to vector<8x1xi1>
    %118 = vector.broadcast %117 : vector<8x1xi1> to vector<8x32xi1>
    %119 = arith.select %118, %107, %116 : vector<8x32xi1>, vector<8x32xf32>
    %cst_29 = arith.constant dense<0.000000e+00> : vector<8x128xf32>
    %120 = tpu.matmul %81, %26, %cst_29 {dimension_numbers = #tpu.dot_dimension_numbers<[1], [0], [0], [1], [0, 0, 1, 1], [], []>} : vector<8x32xf32>, vector<32x128xf32>, vector<8x128xf32> -> vector<8x128xf32>
    %121 = arith.addf %20, %120 : vector<8x128xf32>
    %122 = math.tanh %121 : vector<8x128xf32>
    %cst_30 = arith.constant 5.000000e-01 : f32
    %123 = vector.broadcast %cst_30 : f32 to vector<8x128xf32>
    %124 = arith.mulf %123, %122 : vector<8x128xf32>
    %cst_31 = arith.constant 5.000000e-01 : f32
    %125 = vector.broadcast %cst_31 : f32 to vector<8x128xf32>
    %126 = arith.addf %124, %125 : vector<8x128xf32>
    %127 = arith.select %6, %122, %126 : vector<8x128xi1>, vector<8x128xf32>
    %128 = vector.extract_strided_slice %127 {offsets = [0, 0], sizes = [8, 32], strides = [1, 1]} : vector<8x128xf32> to vector<8x32xf32>
    %129 = vector.extract_strided_slice %127 {offsets = [0, 32], sizes = [8, 32], strides = [1, 1]} : vector<8x128xf32> to vector<8x32xf32>
    %130 = vector.extract_strided_slice %127 {offsets = [0, 64], sizes = [8, 32], strides = [1, 1]} : vector<8x128xf32> to vector<8x32xf32>
    %131 = vector.extract_strided_slice %127 {offsets = [0, 96], sizes = [8, 32], strides = [1, 1]} : vector<8x128xf32> to vector<8x32xf32>
    %132 = arith.mulf %129, %84 : vector<8x32xf32>
    %133 = arith.mulf %128, %130 : vector<8x32xf32>
    %134 = arith.addf %132, %133 : vector<8x32xf32>
    %135 = math.tanh %134 : vector<8x32xf32>
    %136 = arith.mulf %131, %135 : vector<8x32xf32>
    %c2_i32 = arith.constant 2 : i32
    %137 = vector.broadcast %c2_i32 : i32 to vector<8x1xi32>
    %138 = arith.cmpi sgt, %0, %137 : vector<8x1xi32>
    %139 = vector.shape_cast %138 : vector<8x1xi1> to vector<8x1xi1>
    %140 = vector.broadcast %139 : vector<8x1xi1> to vector<8x32xi1>
    %141 = arith.select %140, %136, %81 : vector<8x32xi1>, vector<8x32xf32>
    %142 = vector.shape_cast %138 : vector<8x1xi1> to vector<8x1xi1>
    %143 = vector.broadcast %142 : vector<8x1xi1> to vector<8x32xi1>
    %144 = arith.select %143, %134, %84 : vector<8x32xi1>, vector<8x32xf32>
    %cst_32 = arith.constant 0.000000e+00 : f32
    %145 = vector.broadcast %cst_32 : f32 to vector<8x32xf32>
    %146 = vector.shape_cast %138 : vector<8x1xi1> to vector<8x1xi1>
    %147 = vector.broadcast %146 : vector<8x1xi1> to vector<8x32xi1>
    %148 = arith.select %147, %136, %145 : vector<8x32xi1>, vector<8x32xf32>
    %149 = tpu.concatenate %88, %112 in 1 : vector<8x32xf32>, vector<8x32xf32> -> vector<8x64xf32>
    %cst_33 = arith.constant dense<0.000000e+00> : vector<8x128xf32>
    %150 = tpu.matmul %149, %27, %cst_33 {dimension_numbers = #tpu.dot_dimension_numbers<[1], [0], [0], [1], [0, 0, 1, 1], [], []>} : vector<8x64xf32>, vector<64x128xf32>, vector<8x128xf32> -> vector<8x128xf32>
    %151 = vector.broadcast %28 : vector<1x128xf32> to vector<8x128xf32>
    %152 = arith.addf %150, %151 : vector<8x128xf32>
    %153 = math.tanh %152 : vector<8x128xf32>
    %cst_34 = arith.constant 5.000000e-01 : f32
    %154 = vector.broadcast %cst_34 : f32 to vector<8x128xf32>
    %155 = arith.mulf %154, %153 : vector<8x128xf32>
    %cst_35 = arith.constant 5.000000e-01 : f32
    %156 = vector.broadcast %cst_35 : f32 to vector<8x128xf32>
    %157 = arith.addf %155, %156 : vector<8x128xf32>
    %158 = arith.select %6, %153, %157 : vector<8x128xi1>, vector<8x128xf32>
    %159 = vector.extract_strided_slice %158 {offsets = [0, 0], sizes = [8, 32], strides = [1, 1]} : vector<8x128xf32> to vector<8x32xf32>
    %160 = vector.extract_strided_slice %158 {offsets = [0, 32], sizes = [8, 32], strides = [1, 1]} : vector<8x128xf32> to vector<8x32xf32>
    %161 = vector.extract_strided_slice %158 {offsets = [0, 64], sizes = [8, 32], strides = [1, 1]} : vector<8x128xf32> to vector<8x32xf32>
    %162 = vector.extract_strided_slice %158 {offsets = [0, 96], sizes = [8, 32], strides = [1, 1]} : vector<8x128xf32> to vector<8x32xf32>
    %163 = arith.mulf %160, %115 : vector<8x32xf32>
    %164 = arith.mulf %159, %161 : vector<8x32xf32>
    %165 = arith.addf %163, %164 : vector<8x32xf32>
    %166 = math.tanh %165 : vector<8x32xf32>
    %167 = arith.mulf %162, %166 : vector<8x32xf32>
    %c1_i32_36 = arith.constant 1 : i32
    %168 = vector.broadcast %c1_i32_36 : i32 to vector<8x1xi32>
    %169 = arith.cmpi sgt, %0, %168 : vector<8x1xi32>
    %170 = vector.shape_cast %169 : vector<8x1xi1> to vector<8x1xi1>
    %171 = vector.broadcast %170 : vector<8x1xi1> to vector<8x32xi1>
    %172 = arith.select %171, %167, %112 : vector<8x32xi1>, vector<8x32xf32>
    %173 = vector.shape_cast %169 : vector<8x1xi1> to vector<8x1xi1>
    %174 = vector.broadcast %173 : vector<8x1xi1> to vector<8x32xi1>
    %175 = arith.select %174, %165, %115 : vector<8x32xi1>, vector<8x32xf32>
    %cst_37 = arith.constant 0.000000e+00 : f32
    %176 = vector.broadcast %cst_37 : f32 to vector<8x32xf32>
    %177 = vector.shape_cast %169 : vector<8x1xi1> to vector<8x1xi1>
    %178 = vector.broadcast %177 : vector<8x1xi1> to vector<8x32xi1>
    %179 = arith.select %178, %167, %176 : vector<8x32xi1>, vector<8x32xf32>
    %cst_38 = arith.constant dense<0.000000e+00> : vector<8x128xf32>
    %180 = tpu.matmul %141, %26, %cst_38 {dimension_numbers = #tpu.dot_dimension_numbers<[1], [0], [0], [1], [0, 0, 1, 1], [], []>} : vector<8x32xf32>, vector<32x128xf32>, vector<8x128xf32> -> vector<8x128xf32>
    %181 = arith.addf %21, %180 : vector<8x128xf32>
    %182 = math.tanh %181 : vector<8x128xf32>
    %cst_39 = arith.constant 5.000000e-01 : f32
    %183 = vector.broadcast %cst_39 : f32 to vector<8x128xf32>
    %184 = arith.mulf %183, %182 : vector<8x128xf32>
    %cst_40 = arith.constant 5.000000e-01 : f32
    %185 = vector.broadcast %cst_40 : f32 to vector<8x128xf32>
    %186 = arith.addf %184, %185 : vector<8x128xf32>
    %187 = arith.select %6, %182, %186 : vector<8x128xi1>, vector<8x128xf32>
    %188 = vector.extract_strided_slice %187 {offsets = [0, 0], sizes = [8, 32], strides = [1, 1]} : vector<8x128xf32> to vector<8x32xf32>
    %189 = vector.extract_strided_slice %187 {offsets = [0, 32], sizes = [8, 32], strides = [1, 1]} : vector<8x128xf32> to vector<8x32xf32>
    %190 = vector.extract_strided_slice %187 {offsets = [0, 64], sizes = [8, 32], strides = [1, 1]} : vector<8x128xf32> to vector<8x32xf32>
    %191 = vector.extract_strided_slice %187 {offsets = [0, 96], sizes = [8, 32], strides = [1, 1]} : vector<8x128xf32> to vector<8x32xf32>
    %192 = arith.mulf %189, %144 : vector<8x32xf32>
    %193 = arith.mulf %188, %190 : vector<8x32xf32>
    %194 = arith.addf %192, %193 : vector<8x32xf32>
    %195 = math.tanh %194 : vector<8x32xf32>
    %196 = arith.mulf %191, %195 : vector<8x32xf32>
    %c3_i32 = arith.constant 3 : i32
    %197 = vector.broadcast %c3_i32 : i32 to vector<8x1xi32>
    %198 = arith.cmpi sgt, %0, %197 : vector<8x1xi32>
    %199 = vector.shape_cast %198 : vector<8x1xi1> to vector<8x1xi1>
    %200 = vector.broadcast %199 : vector<8x1xi1> to vector<8x32xi1>
    %201 = arith.select %200, %196, %141 : vector<8x32xi1>, vector<8x32xf32>
    %202 = vector.shape_cast %198 : vector<8x1xi1> to vector<8x1xi1>
    %203 = vector.broadcast %202 : vector<8x1xi1> to vector<8x32xi1>
    %204 = arith.select %203, %194, %144 : vector<8x32xi1>, vector<8x32xf32>
    %cst_41 = arith.constant 0.000000e+00 : f32
    %205 = vector.broadcast %cst_41 : f32 to vector<8x32xf32>
    %206 = vector.shape_cast %198 : vector<8x1xi1> to vector<8x1xi1>
    %207 = vector.broadcast %206 : vector<8x1xi1> to vector<8x32xi1>
    %208 = arith.select %207, %196, %205 : vector<8x32xi1>, vector<8x32xf32>
    %209 = tpu.concatenate %148, %172 in 1 : vector<8x32xf32>, vector<8x32xf32> -> vector<8x64xf32>
    %cst_42 = arith.constant dense<0.000000e+00> : vector<8x128xf32>
    %210 = tpu.matmul %209, %27, %cst_42 {dimension_numbers = #tpu.dot_dimension_numbers<[1], [0], [0], [1], [0, 0, 1, 1], [], []>} : vector<8x64xf32>, vector<64x128xf32>, vector<8x128xf32> -> vector<8x128xf32>
    %211 = vector.broadcast %28 : vector<1x128xf32> to vector<8x128xf32>
    %212 = arith.addf %210, %211 : vector<8x128xf32>
    %213 = math.tanh %212 : vector<8x128xf32>
    %cst_43 = arith.constant 5.000000e-01 : f32
    %214 = vector.broadcast %cst_43 : f32 to vector<8x128xf32>
    %215 = arith.mulf %214, %213 : vector<8x128xf32>
    %cst_44 = arith.constant 5.000000e-01 : f32
    %216 = vector.broadcast %cst_44 : f32 to vector<8x128xf32>
    %217 = arith.addf %215, %216 : vector<8x128xf32>
    %218 = arith.select %6, %213, %217 : vector<8x128xi1>, vector<8x128xf32>
    %219 = vector.extract_strided_slice %218 {offsets = [0, 0], sizes = [8, 32], strides = [1, 1]} : vector<8x128xf32> to vector<8x32xf32>
    %220 = vector.extract_strided_slice %218 {offsets = [0, 32], sizes = [8, 32], strides = [1, 1]} : vector<8x128xf32> to vector<8x32xf32>
    %221 = vector.extract_strided_slice %218 {offsets = [0, 64], sizes = [8, 32], strides = [1, 1]} : vector<8x128xf32> to vector<8x32xf32>
    %222 = vector.extract_strided_slice %218 {offsets = [0, 96], sizes = [8, 32], strides = [1, 1]} : vector<8x128xf32> to vector<8x32xf32>
    %223 = arith.mulf %220, %175 : vector<8x32xf32>
    %224 = arith.mulf %219, %221 : vector<8x32xf32>
    %225 = arith.addf %223, %224 : vector<8x32xf32>
    %226 = math.tanh %225 : vector<8x32xf32>
    %227 = arith.mulf %222, %226 : vector<8x32xf32>
    %c2_i32_45 = arith.constant 2 : i32
    %228 = vector.broadcast %c2_i32_45 : i32 to vector<8x1xi32>
    %229 = arith.cmpi sgt, %0, %228 : vector<8x1xi32>
    %230 = vector.shape_cast %229 : vector<8x1xi1> to vector<8x1xi1>
    %231 = vector.broadcast %230 : vector<8x1xi1> to vector<8x32xi1>
    %232 = arith.select %231, %227, %172 : vector<8x32xi1>, vector<8x32xf32>
    %233 = vector.shape_cast %229 : vector<8x1xi1> to vector<8x1xi1>
    %234 = vector.broadcast %233 : vector<8x1xi1> to vector<8x32xi1>
    %235 = arith.select %234, %225, %175 : vector<8x32xi1>, vector<8x32xf32>
    %cst_46 = arith.constant 0.000000e+00 : f32
    %236 = vector.broadcast %cst_46 : f32 to vector<8x32xf32>
    %237 = vector.shape_cast %229 : vector<8x1xi1> to vector<8x1xi1>
    %238 = vector.broadcast %237 : vector<8x1xi1> to vector<8x32xi1>
    %239 = arith.select %238, %227, %236 : vector<8x32xi1>, vector<8x32xf32>
    %cst_47 = arith.constant dense<0.000000e+00> : vector<8x128xf32>
    %240 = tpu.matmul %201, %26, %cst_47 {dimension_numbers = #tpu.dot_dimension_numbers<[1], [0], [0], [1], [0, 0, 1, 1], [], []>} : vector<8x32xf32>, vector<32x128xf32>, vector<8x128xf32> -> vector<8x128xf32>
    %241 = arith.addf %22, %240 : vector<8x128xf32>
    %242 = math.tanh %241 : vector<8x128xf32>
    %cst_48 = arith.constant 5.000000e-01 : f32
    %243 = vector.broadcast %cst_48 : f32 to vector<8x128xf32>
    %244 = arith.mulf %243, %242 : vector<8x128xf32>
    %cst_49 = arith.constant 5.000000e-01 : f32
    %245 = vector.broadcast %cst_49 : f32 to vector<8x128xf32>
    %246 = arith.addf %244, %245 : vector<8x128xf32>
    %247 = arith.select %6, %242, %246 : vector<8x128xi1>, vector<8x128xf32>
    %248 = vector.extract_strided_slice %247 {offsets = [0, 0], sizes = [8, 32], strides = [1, 1]} : vector<8x128xf32> to vector<8x32xf32>
    %249 = vector.extract_strided_slice %247 {offsets = [0, 32], sizes = [8, 32], strides = [1, 1]} : vector<8x128xf32> to vector<8x32xf32>
    %250 = vector.extract_strided_slice %247 {offsets = [0, 64], sizes = [8, 32], strides = [1, 1]} : vector<8x128xf32> to vector<8x32xf32>
    %251 = vector.extract_strided_slice %247 {offsets = [0, 96], sizes = [8, 32], strides = [1, 1]} : vector<8x128xf32> to vector<8x32xf32>
    %252 = arith.mulf %249, %204 : vector<8x32xf32>
    %253 = arith.mulf %248, %250 : vector<8x32xf32>
    %254 = arith.addf %252, %253 : vector<8x32xf32>
    %255 = math.tanh %254 : vector<8x32xf32>
    %256 = arith.mulf %251, %255 : vector<8x32xf32>
    %c4_i32 = arith.constant 4 : i32
    %257 = vector.broadcast %c4_i32 : i32 to vector<8x1xi32>
    %258 = arith.cmpi sgt, %0, %257 : vector<8x1xi32>
    %259 = vector.shape_cast %258 : vector<8x1xi1> to vector<8x1xi1>
    %260 = vector.broadcast %259 : vector<8x1xi1> to vector<8x32xi1>
    %261 = arith.select %260, %256, %201 : vector<8x32xi1>, vector<8x32xf32>
    %262 = vector.shape_cast %258 : vector<8x1xi1> to vector<8x1xi1>
    %263 = vector.broadcast %262 : vector<8x1xi1> to vector<8x32xi1>
    %264 = arith.select %263, %254, %204 : vector<8x32xi1>, vector<8x32xf32>
    %cst_50 = arith.constant 0.000000e+00 : f32
    %265 = vector.broadcast %cst_50 : f32 to vector<8x32xf32>
    %266 = vector.shape_cast %258 : vector<8x1xi1> to vector<8x1xi1>
    %267 = vector.broadcast %266 : vector<8x1xi1> to vector<8x32xi1>
    %268 = arith.select %267, %256, %265 : vector<8x32xi1>, vector<8x32xf32>
    %269 = tpu.concatenate %208, %232 in 1 : vector<8x32xf32>, vector<8x32xf32> -> vector<8x64xf32>
    %cst_51 = arith.constant dense<0.000000e+00> : vector<8x128xf32>
    %270 = tpu.matmul %269, %27, %cst_51 {dimension_numbers = #tpu.dot_dimension_numbers<[1], [0], [0], [1], [0, 0, 1, 1], [], []>} : vector<8x64xf32>, vector<64x128xf32>, vector<8x128xf32> -> vector<8x128xf32>
    %271 = vector.broadcast %28 : vector<1x128xf32> to vector<8x128xf32>
    %272 = arith.addf %270, %271 : vector<8x128xf32>
    %273 = math.tanh %272 : vector<8x128xf32>
    %cst_52 = arith.constant 5.000000e-01 : f32
    %274 = vector.broadcast %cst_52 : f32 to vector<8x128xf32>
    %275 = arith.mulf %274, %273 : vector<8x128xf32>
    %cst_53 = arith.constant 5.000000e-01 : f32
    %276 = vector.broadcast %cst_53 : f32 to vector<8x128xf32>
    %277 = arith.addf %275, %276 : vector<8x128xf32>
    %278 = arith.select %6, %273, %277 : vector<8x128xi1>, vector<8x128xf32>
    %279 = vector.extract_strided_slice %278 {offsets = [0, 0], sizes = [8, 32], strides = [1, 1]} : vector<8x128xf32> to vector<8x32xf32>
    %280 = vector.extract_strided_slice %278 {offsets = [0, 32], sizes = [8, 32], strides = [1, 1]} : vector<8x128xf32> to vector<8x32xf32>
    %281 = vector.extract_strided_slice %278 {offsets = [0, 64], sizes = [8, 32], strides = [1, 1]} : vector<8x128xf32> to vector<8x32xf32>
    %282 = vector.extract_strided_slice %278 {offsets = [0, 96], sizes = [8, 32], strides = [1, 1]} : vector<8x128xf32> to vector<8x32xf32>
    %283 = arith.mulf %280, %235 : vector<8x32xf32>
    %284 = arith.mulf %279, %281 : vector<8x32xf32>
    %285 = arith.addf %283, %284 : vector<8x32xf32>
    %286 = math.tanh %285 : vector<8x32xf32>
    %287 = arith.mulf %282, %286 : vector<8x32xf32>
    %c3_i32_54 = arith.constant 3 : i32
    %288 = vector.broadcast %c3_i32_54 : i32 to vector<8x1xi32>
    %289 = arith.cmpi sgt, %0, %288 : vector<8x1xi32>
    %290 = vector.shape_cast %289 : vector<8x1xi1> to vector<8x1xi1>
    %291 = vector.broadcast %290 : vector<8x1xi1> to vector<8x32xi1>
    %292 = arith.select %291, %287, %232 : vector<8x32xi1>, vector<8x32xf32>
    %293 = vector.shape_cast %289 : vector<8x1xi1> to vector<8x1xi1>
    %294 = vector.broadcast %293 : vector<8x1xi1> to vector<8x32xi1>
    %295 = arith.select %294, %285, %235 : vector<8x32xi1>, vector<8x32xf32>
    %cst_55 = arith.constant 0.000000e+00 : f32
    %296 = vector.broadcast %cst_55 : f32 to vector<8x32xf32>
    %297 = vector.shape_cast %289 : vector<8x1xi1> to vector<8x1xi1>
    %298 = vector.broadcast %297 : vector<8x1xi1> to vector<8x32xi1>
    %299 = arith.select %298, %287, %296 : vector<8x32xi1>, vector<8x32xf32>
    %cst_56 = arith.constant dense<0.000000e+00> : vector<8x128xf32>
    %300 = tpu.matmul %261, %26, %cst_56 {dimension_numbers = #tpu.dot_dimension_numbers<[1], [0], [0], [1], [0, 0, 1, 1], [], []>} : vector<8x32xf32>, vector<32x128xf32>, vector<8x128xf32> -> vector<8x128xf32>
    %301 = arith.addf %23, %300 : vector<8x128xf32>
    %302 = math.tanh %301 : vector<8x128xf32>
    %cst_57 = arith.constant 5.000000e-01 : f32
    %303 = vector.broadcast %cst_57 : f32 to vector<8x128xf32>
    %304 = arith.mulf %303, %302 : vector<8x128xf32>
    %cst_58 = arith.constant 5.000000e-01 : f32
    %305 = vector.broadcast %cst_58 : f32 to vector<8x128xf32>
    %306 = arith.addf %304, %305 : vector<8x128xf32>
    %307 = arith.select %6, %302, %306 : vector<8x128xi1>, vector<8x128xf32>
    %308 = vector.extract_strided_slice %307 {offsets = [0, 0], sizes = [8, 32], strides = [1, 1]} : vector<8x128xf32> to vector<8x32xf32>
    %309 = vector.extract_strided_slice %307 {offsets = [0, 32], sizes = [8, 32], strides = [1, 1]} : vector<8x128xf32> to vector<8x32xf32>
    %310 = vector.extract_strided_slice %307 {offsets = [0, 64], sizes = [8, 32], strides = [1, 1]} : vector<8x128xf32> to vector<8x32xf32>
    %311 = vector.extract_strided_slice %307 {offsets = [0, 96], sizes = [8, 32], strides = [1, 1]} : vector<8x128xf32> to vector<8x32xf32>
    %312 = arith.mulf %309, %264 : vector<8x32xf32>
    %313 = arith.mulf %308, %310 : vector<8x32xf32>
    %314 = arith.addf %312, %313 : vector<8x32xf32>
    %315 = math.tanh %314 : vector<8x32xf32>
    %316 = arith.mulf %311, %315 : vector<8x32xf32>
    %c5_i32 = arith.constant 5 : i32
    %317 = vector.broadcast %c5_i32 : i32 to vector<8x1xi32>
    %318 = arith.cmpi sgt, %0, %317 : vector<8x1xi32>
    %319 = vector.shape_cast %318 : vector<8x1xi1> to vector<8x1xi1>
    %320 = vector.broadcast %319 : vector<8x1xi1> to vector<8x32xi1>
    %321 = arith.select %320, %316, %261 : vector<8x32xi1>, vector<8x32xf32>
    %322 = vector.shape_cast %318 : vector<8x1xi1> to vector<8x1xi1>
    %323 = vector.broadcast %322 : vector<8x1xi1> to vector<8x32xi1>
    %324 = arith.select %323, %314, %264 : vector<8x32xi1>, vector<8x32xf32>
    %cst_59 = arith.constant 0.000000e+00 : f32
    %325 = vector.broadcast %cst_59 : f32 to vector<8x32xf32>
    %326 = vector.shape_cast %318 : vector<8x1xi1> to vector<8x1xi1>
    %327 = vector.broadcast %326 : vector<8x1xi1> to vector<8x32xi1>
    %328 = arith.select %327, %316, %325 : vector<8x32xi1>, vector<8x32xf32>
    %329 = tpu.concatenate %268, %292 in 1 : vector<8x32xf32>, vector<8x32xf32> -> vector<8x64xf32>
    %cst_60 = arith.constant dense<0.000000e+00> : vector<8x128xf32>
    %330 = tpu.matmul %329, %27, %cst_60 {dimension_numbers = #tpu.dot_dimension_numbers<[1], [0], [0], [1], [0, 0, 1, 1], [], []>} : vector<8x64xf32>, vector<64x128xf32>, vector<8x128xf32> -> vector<8x128xf32>
    %331 = vector.broadcast %28 : vector<1x128xf32> to vector<8x128xf32>
    %332 = arith.addf %330, %331 : vector<8x128xf32>
    %333 = math.tanh %332 : vector<8x128xf32>
    %cst_61 = arith.constant 5.000000e-01 : f32
    %334 = vector.broadcast %cst_61 : f32 to vector<8x128xf32>
    %335 = arith.mulf %334, %333 : vector<8x128xf32>
    %cst_62 = arith.constant 5.000000e-01 : f32
    %336 = vector.broadcast %cst_62 : f32 to vector<8x128xf32>
    %337 = arith.addf %335, %336 : vector<8x128xf32>
    %338 = arith.select %6, %333, %337 : vector<8x128xi1>, vector<8x128xf32>
    %339 = vector.extract_strided_slice %338 {offsets = [0, 0], sizes = [8, 32], strides = [1, 1]} : vector<8x128xf32> to vector<8x32xf32>
    %340 = vector.extract_strided_slice %338 {offsets = [0, 32], sizes = [8, 32], strides = [1, 1]} : vector<8x128xf32> to vector<8x32xf32>
    %341 = vector.extract_strided_slice %338 {offsets = [0, 64], sizes = [8, 32], strides = [1, 1]} : vector<8x128xf32> to vector<8x32xf32>
    %342 = vector.extract_strided_slice %338 {offsets = [0, 96], sizes = [8, 32], strides = [1, 1]} : vector<8x128xf32> to vector<8x32xf32>
    %343 = arith.mulf %340, %295 : vector<8x32xf32>
    %344 = arith.mulf %339, %341 : vector<8x32xf32>
    %345 = arith.addf %343, %344 : vector<8x32xf32>
    %346 = math.tanh %345 : vector<8x32xf32>
    %347 = arith.mulf %342, %346 : vector<8x32xf32>
    %c4_i32_63 = arith.constant 4 : i32
    %348 = vector.broadcast %c4_i32_63 : i32 to vector<8x1xi32>
    %349 = arith.cmpi sgt, %0, %348 : vector<8x1xi32>
    %350 = vector.shape_cast %349 : vector<8x1xi1> to vector<8x1xi1>
    %351 = vector.broadcast %350 : vector<8x1xi1> to vector<8x32xi1>
    %352 = arith.select %351, %347, %292 : vector<8x32xi1>, vector<8x32xf32>
    %353 = vector.shape_cast %349 : vector<8x1xi1> to vector<8x1xi1>
    %354 = vector.broadcast %353 : vector<8x1xi1> to vector<8x32xi1>
    %355 = arith.select %354, %345, %295 : vector<8x32xi1>, vector<8x32xf32>
    %cst_64 = arith.constant 0.000000e+00 : f32
    %356 = vector.broadcast %cst_64 : f32 to vector<8x32xf32>
    %357 = vector.shape_cast %349 : vector<8x1xi1> to vector<8x1xi1>
    %358 = vector.broadcast %357 : vector<8x1xi1> to vector<8x32xi1>
    %359 = arith.select %358, %347, %356 : vector<8x32xi1>, vector<8x32xf32>
    %cst_65 = arith.constant dense<0.000000e+00> : vector<8x128xf32>
    %360 = tpu.matmul %321, %26, %cst_65 {dimension_numbers = #tpu.dot_dimension_numbers<[1], [0], [0], [1], [0, 0, 1, 1], [], []>} : vector<8x32xf32>, vector<32x128xf32>, vector<8x128xf32> -> vector<8x128xf32>
    %361 = arith.addf %24, %360 : vector<8x128xf32>
    %362 = math.tanh %361 : vector<8x128xf32>
    %cst_66 = arith.constant 5.000000e-01 : f32
    %363 = vector.broadcast %cst_66 : f32 to vector<8x128xf32>
    %364 = arith.mulf %363, %362 : vector<8x128xf32>
    %cst_67 = arith.constant 5.000000e-01 : f32
    %365 = vector.broadcast %cst_67 : f32 to vector<8x128xf32>
    %366 = arith.addf %364, %365 : vector<8x128xf32>
    %367 = arith.select %6, %362, %366 : vector<8x128xi1>, vector<8x128xf32>
    %368 = vector.extract_strided_slice %367 {offsets = [0, 0], sizes = [8, 32], strides = [1, 1]} : vector<8x128xf32> to vector<8x32xf32>
    %369 = vector.extract_strided_slice %367 {offsets = [0, 32], sizes = [8, 32], strides = [1, 1]} : vector<8x128xf32> to vector<8x32xf32>
    %370 = vector.extract_strided_slice %367 {offsets = [0, 64], sizes = [8, 32], strides = [1, 1]} : vector<8x128xf32> to vector<8x32xf32>
    %371 = vector.extract_strided_slice %367 {offsets = [0, 96], sizes = [8, 32], strides = [1, 1]} : vector<8x128xf32> to vector<8x32xf32>
    %372 = arith.mulf %369, %324 : vector<8x32xf32>
    %373 = arith.mulf %368, %370 : vector<8x32xf32>
    %374 = arith.addf %372, %373 : vector<8x32xf32>
    %375 = math.tanh %374 : vector<8x32xf32>
    %376 = arith.mulf %371, %375 : vector<8x32xf32>
    %c6_i32 = arith.constant 6 : i32
    %377 = vector.broadcast %c6_i32 : i32 to vector<8x1xi32>
    %378 = arith.cmpi sgt, %0, %377 : vector<8x1xi32>
    %379 = vector.shape_cast %378 : vector<8x1xi1> to vector<8x1xi1>
    %380 = vector.broadcast %379 : vector<8x1xi1> to vector<8x32xi1>
    %381 = arith.select %380, %376, %321 : vector<8x32xi1>, vector<8x32xf32>
    %382 = vector.shape_cast %378 : vector<8x1xi1> to vector<8x1xi1>
    %383 = vector.broadcast %382 : vector<8x1xi1> to vector<8x32xi1>
    %384 = arith.select %383, %374, %324 : vector<8x32xi1>, vector<8x32xf32>
    %cst_68 = arith.constant 0.000000e+00 : f32
    %385 = vector.broadcast %cst_68 : f32 to vector<8x32xf32>
    %386 = vector.shape_cast %378 : vector<8x1xi1> to vector<8x1xi1>
    %387 = vector.broadcast %386 : vector<8x1xi1> to vector<8x32xi1>
    %388 = arith.select %387, %376, %385 : vector<8x32xi1>, vector<8x32xf32>
    %389 = tpu.concatenate %328, %352 in 1 : vector<8x32xf32>, vector<8x32xf32> -> vector<8x64xf32>
    %cst_69 = arith.constant dense<0.000000e+00> : vector<8x128xf32>
    %390 = tpu.matmul %389, %27, %cst_69 {dimension_numbers = #tpu.dot_dimension_numbers<[1], [0], [0], [1], [0, 0, 1, 1], [], []>} : vector<8x64xf32>, vector<64x128xf32>, vector<8x128xf32> -> vector<8x128xf32>
    %391 = vector.broadcast %28 : vector<1x128xf32> to vector<8x128xf32>
    %392 = arith.addf %390, %391 : vector<8x128xf32>
    %393 = math.tanh %392 : vector<8x128xf32>
    %cst_70 = arith.constant 5.000000e-01 : f32
    %394 = vector.broadcast %cst_70 : f32 to vector<8x128xf32>
    %395 = arith.mulf %394, %393 : vector<8x128xf32>
    %cst_71 = arith.constant 5.000000e-01 : f32
    %396 = vector.broadcast %cst_71 : f32 to vector<8x128xf32>
    %397 = arith.addf %395, %396 : vector<8x128xf32>
    %398 = arith.select %6, %393, %397 : vector<8x128xi1>, vector<8x128xf32>
    %399 = vector.extract_strided_slice %398 {offsets = [0, 0], sizes = [8, 32], strides = [1, 1]} : vector<8x128xf32> to vector<8x32xf32>
    %400 = vector.extract_strided_slice %398 {offsets = [0, 32], sizes = [8, 32], strides = [1, 1]} : vector<8x128xf32> to vector<8x32xf32>
    %401 = vector.extract_strided_slice %398 {offsets = [0, 64], sizes = [8, 32], strides = [1, 1]} : vector<8x128xf32> to vector<8x32xf32>
    %402 = vector.extract_strided_slice %398 {offsets = [0, 96], sizes = [8, 32], strides = [1, 1]} : vector<8x128xf32> to vector<8x32xf32>
    %403 = arith.mulf %400, %355 : vector<8x32xf32>
    %404 = arith.mulf %399, %401 : vector<8x32xf32>
    %405 = arith.addf %403, %404 : vector<8x32xf32>
    %406 = math.tanh %405 : vector<8x32xf32>
    %407 = arith.mulf %402, %406 : vector<8x32xf32>
    %c5_i32_72 = arith.constant 5 : i32
    %408 = vector.broadcast %c5_i32_72 : i32 to vector<8x1xi32>
    %409 = arith.cmpi sgt, %0, %408 : vector<8x1xi32>
    %410 = vector.shape_cast %409 : vector<8x1xi1> to vector<8x1xi1>
    %411 = vector.broadcast %410 : vector<8x1xi1> to vector<8x32xi1>
    %412 = arith.select %411, %407, %352 : vector<8x32xi1>, vector<8x32xf32>
    %413 = vector.shape_cast %409 : vector<8x1xi1> to vector<8x1xi1>
    %414 = vector.broadcast %413 : vector<8x1xi1> to vector<8x32xi1>
    %415 = arith.select %414, %405, %355 : vector<8x32xi1>, vector<8x32xf32>
    %cst_73 = arith.constant 0.000000e+00 : f32
    %416 = vector.broadcast %cst_73 : f32 to vector<8x32xf32>
    %417 = vector.shape_cast %409 : vector<8x1xi1> to vector<8x1xi1>
    %418 = vector.broadcast %417 : vector<8x1xi1> to vector<8x32xi1>
    %419 = arith.select %418, %407, %416 : vector<8x32xi1>, vector<8x32xf32>
    %cst_74 = arith.constant dense<0.000000e+00> : vector<8x128xf32>
    %420 = tpu.matmul %381, %26, %cst_74 {dimension_numbers = #tpu.dot_dimension_numbers<[1], [0], [0], [1], [0, 0, 1, 1], [], []>} : vector<8x32xf32>, vector<32x128xf32>, vector<8x128xf32> -> vector<8x128xf32>
    %421 = arith.addf %25, %420 : vector<8x128xf32>
    %422 = math.tanh %421 : vector<8x128xf32>
    %cst_75 = arith.constant 5.000000e-01 : f32
    %423 = vector.broadcast %cst_75 : f32 to vector<8x128xf32>
    %424 = arith.mulf %423, %422 : vector<8x128xf32>
    %cst_76 = arith.constant 5.000000e-01 : f32
    %425 = vector.broadcast %cst_76 : f32 to vector<8x128xf32>
    %426 = arith.addf %424, %425 : vector<8x128xf32>
    %427 = arith.select %6, %422, %426 : vector<8x128xi1>, vector<8x128xf32>
    %428 = vector.extract_strided_slice %427 {offsets = [0, 0], sizes = [8, 32], strides = [1, 1]} : vector<8x128xf32> to vector<8x32xf32>
    %429 = vector.extract_strided_slice %427 {offsets = [0, 32], sizes = [8, 32], strides = [1, 1]} : vector<8x128xf32> to vector<8x32xf32>
    %430 = vector.extract_strided_slice %427 {offsets = [0, 64], sizes = [8, 32], strides = [1, 1]} : vector<8x128xf32> to vector<8x32xf32>
    %431 = vector.extract_strided_slice %427 {offsets = [0, 96], sizes = [8, 32], strides = [1, 1]} : vector<8x128xf32> to vector<8x32xf32>
    %432 = arith.mulf %429, %384 : vector<8x32xf32>
    %433 = arith.mulf %428, %430 : vector<8x32xf32>
    %434 = arith.addf %432, %433 : vector<8x32xf32>
    %435 = math.tanh %434 : vector<8x32xf32>
    %436 = arith.mulf %431, %435 : vector<8x32xf32>
    %c7_i32 = arith.constant 7 : i32
    %437 = vector.broadcast %c7_i32 : i32 to vector<8x1xi32>
    %438 = arith.cmpi sgt, %0, %437 : vector<8x1xi32>
    %439 = vector.shape_cast %438 : vector<8x1xi1> to vector<8x1xi1>
    %440 = vector.broadcast %439 : vector<8x1xi1> to vector<8x32xi1>
    %441 = arith.select %440, %436, %381 : vector<8x32xi1>, vector<8x32xf32>
    %442 = vector.shape_cast %438 : vector<8x1xi1> to vector<8x1xi1>
    %443 = vector.broadcast %442 : vector<8x1xi1> to vector<8x32xi1>
    %444 = arith.select %443, %434, %384 : vector<8x32xi1>, vector<8x32xf32>
    %cst_77 = arith.constant 0.000000e+00 : f32
    %445 = vector.broadcast %cst_77 : f32 to vector<8x32xf32>
    %446 = vector.shape_cast %438 : vector<8x1xi1> to vector<8x1xi1>
    %447 = vector.broadcast %446 : vector<8x1xi1> to vector<8x32xi1>
    %448 = arith.select %447, %436, %445 : vector<8x32xi1>, vector<8x32xf32>
    %449 = tpu.concatenate %388, %412 in 1 : vector<8x32xf32>, vector<8x32xf32> -> vector<8x64xf32>
    %cst_78 = arith.constant dense<0.000000e+00> : vector<8x128xf32>
    %450 = tpu.matmul %449, %27, %cst_78 {dimension_numbers = #tpu.dot_dimension_numbers<[1], [0], [0], [1], [0, 0, 1, 1], [], []>} : vector<8x64xf32>, vector<64x128xf32>, vector<8x128xf32> -> vector<8x128xf32>
    %451 = vector.broadcast %28 : vector<1x128xf32> to vector<8x128xf32>
    %452 = arith.addf %450, %451 : vector<8x128xf32>
    %453 = math.tanh %452 : vector<8x128xf32>
    %cst_79 = arith.constant 5.000000e-01 : f32
    %454 = vector.broadcast %cst_79 : f32 to vector<8x128xf32>
    %455 = arith.mulf %454, %453 : vector<8x128xf32>
    %cst_80 = arith.constant 5.000000e-01 : f32
    %456 = vector.broadcast %cst_80 : f32 to vector<8x128xf32>
    %457 = arith.addf %455, %456 : vector<8x128xf32>
    %458 = arith.select %6, %453, %457 : vector<8x128xi1>, vector<8x128xf32>
    %459 = vector.extract_strided_slice %458 {offsets = [0, 0], sizes = [8, 32], strides = [1, 1]} : vector<8x128xf32> to vector<8x32xf32>
    %460 = vector.extract_strided_slice %458 {offsets = [0, 32], sizes = [8, 32], strides = [1, 1]} : vector<8x128xf32> to vector<8x32xf32>
    %461 = vector.extract_strided_slice %458 {offsets = [0, 64], sizes = [8, 32], strides = [1, 1]} : vector<8x128xf32> to vector<8x32xf32>
    %462 = vector.extract_strided_slice %458 {offsets = [0, 96], sizes = [8, 32], strides = [1, 1]} : vector<8x128xf32> to vector<8x32xf32>
    %463 = arith.mulf %460, %415 : vector<8x32xf32>
    %464 = arith.mulf %459, %461 : vector<8x32xf32>
    %465 = arith.addf %463, %464 : vector<8x32xf32>
    %466 = math.tanh %465 : vector<8x32xf32>
    %467 = arith.mulf %462, %466 : vector<8x32xf32>
    %c6_i32_81 = arith.constant 6 : i32
    %468 = vector.broadcast %c6_i32_81 : i32 to vector<8x1xi32>
    %469 = arith.cmpi sgt, %0, %468 : vector<8x1xi32>
    %470 = vector.shape_cast %469 : vector<8x1xi1> to vector<8x1xi1>
    %471 = vector.broadcast %470 : vector<8x1xi1> to vector<8x32xi1>
    %472 = arith.select %471, %467, %412 : vector<8x32xi1>, vector<8x32xf32>
    %473 = vector.shape_cast %469 : vector<8x1xi1> to vector<8x1xi1>
    %474 = vector.broadcast %473 : vector<8x1xi1> to vector<8x32xi1>
    %475 = arith.select %474, %465, %415 : vector<8x32xi1>, vector<8x32xf32>
    %cst_82 = arith.constant 0.000000e+00 : f32
    %476 = vector.broadcast %cst_82 : f32 to vector<8x32xf32>
    %477 = vector.shape_cast %469 : vector<8x1xi1> to vector<8x1xi1>
    %478 = vector.broadcast %477 : vector<8x1xi1> to vector<8x32xi1>
    %479 = arith.select %478, %467, %476 : vector<8x32xi1>, vector<8x32xf32>
    %480 = tpu.concatenate %448, %472 in 1 : vector<8x32xf32>, vector<8x32xf32> -> vector<8x64xf32>
    %cst_83 = arith.constant dense<0.000000e+00> : vector<8x128xf32>
    %481 = tpu.matmul %480, %27, %cst_83 {dimension_numbers = #tpu.dot_dimension_numbers<[1], [0], [0], [1], [0, 0, 1, 1], [], []>} : vector<8x64xf32>, vector<64x128xf32>, vector<8x128xf32> -> vector<8x128xf32>
    %482 = vector.broadcast %28 : vector<1x128xf32> to vector<8x128xf32>
    %483 = arith.addf %481, %482 : vector<8x128xf32>
    %484 = math.tanh %483 : vector<8x128xf32>
    %cst_84 = arith.constant 5.000000e-01 : f32
    %485 = vector.broadcast %cst_84 : f32 to vector<8x128xf32>
    %486 = arith.mulf %485, %484 : vector<8x128xf32>
    %cst_85 = arith.constant 5.000000e-01 : f32
    %487 = vector.broadcast %cst_85 : f32 to vector<8x128xf32>
    %488 = arith.addf %486, %487 : vector<8x128xf32>
    %489 = arith.select %6, %484, %488 : vector<8x128xi1>, vector<8x128xf32>
    %490 = vector.extract_strided_slice %489 {offsets = [0, 0], sizes = [8, 32], strides = [1, 1]} : vector<8x128xf32> to vector<8x32xf32>
    %491 = vector.extract_strided_slice %489 {offsets = [0, 32], sizes = [8, 32], strides = [1, 1]} : vector<8x128xf32> to vector<8x32xf32>
    %492 = vector.extract_strided_slice %489 {offsets = [0, 64], sizes = [8, 32], strides = [1, 1]} : vector<8x128xf32> to vector<8x32xf32>
    %493 = vector.extract_strided_slice %489 {offsets = [0, 96], sizes = [8, 32], strides = [1, 1]} : vector<8x128xf32> to vector<8x32xf32>
    %494 = arith.mulf %491, %475 : vector<8x32xf32>
    %495 = arith.mulf %490, %492 : vector<8x32xf32>
    %496 = arith.addf %494, %495 : vector<8x32xf32>
    %497 = math.tanh %496 : vector<8x32xf32>
    %498 = arith.mulf %493, %497 : vector<8x32xf32>
    %c7_i32_86 = arith.constant 7 : i32
    %499 = vector.broadcast %c7_i32_86 : i32 to vector<8x1xi32>
    %500 = arith.cmpi sgt, %0, %499 : vector<8x1xi32>
    %501 = vector.shape_cast %500 : vector<8x1xi1> to vector<8x1xi1>
    %502 = vector.broadcast %501 : vector<8x1xi1> to vector<8x32xi1>
    %503 = arith.select %502, %498, %472 : vector<8x32xi1>, vector<8x32xf32>
    %504 = vector.shape_cast %500 : vector<8x1xi1> to vector<8x1xi1>
    %505 = vector.broadcast %504 : vector<8x1xi1> to vector<8x32xi1>
    %506 = arith.select %505, %496, %475 : vector<8x32xi1>, vector<8x32xf32>
    %cst_87 = arith.constant 0.000000e+00 : f32
    %507 = vector.broadcast %cst_87 : f32 to vector<8x32xf32>
    %508 = vector.shape_cast %500 : vector<8x1xi1> to vector<8x1xi1>
    %509 = vector.broadcast %508 : vector<8x1xi1> to vector<8x32xi1>
    %510 = arith.select %509, %498, %507 : vector<8x32xi1>, vector<8x32xf32>
    %511 = tpu.concatenate %119, %179, %239, %299, %359, %419, %479, %510 in 1 : vector<8x32xf32>, vector<8x32xf32>, vector<8x32xf32>, vector<8x32xf32>, vector<8x32xf32>, vector<8x32xf32>, vector<8x32xf32>, vector<8x32xf32> -> vector<8x256xf32>
    %c0_88 = arith.constant 0 : index
    %c0_89 = arith.constant 0 : index
    %512 = vector.load %arg7[%c0_88, %c0_89] : memref<8x256xf32, #tpu.memory_space<vmem>>, vector<8x256xf32>
    tpu.vector_store %arg7[%c0_88, %c0_89], %511 {strides = array<i32>} : memref<8x256xf32, #tpu.memory_space<vmem>>, vector<8x256xf32>,
    %c0_90 = arith.constant 0 : index
    %c0_91 = arith.constant 0 : index
    %c0_92 = arith.constant 0 : index
    %513 = vector.load %arg8[%c0_90, %c0_91, %c0_92] : memref<2x8x32xf32, #tpu.memory_space<vmem>>, vector<1x8x32xf32>
    %514 = vector.shape_cast %513 : vector<1x8x32xf32> to vector<8x32xf32>
    %515 = vector.shape_cast %441 : vector<8x32xf32> to vector<1x8x32xf32>
    tpu.vector_store %arg8[%c0_90, %c0_91, %c0_92], %515 {strides = array<i32>} : memref<2x8x32xf32, #tpu.memory_space<vmem>>, vector<1x8x32xf32>,
    %c0_93 = arith.constant 0 : index
    %c0_94 = arith.constant 0 : index
    %c0_95 = arith.constant 0 : index
    %516 = vector.load %arg9[%c0_93, %c0_94, %c0_95] : memref<2x8x32xf32, #tpu.memory_space<vmem>>, vector<1x8x32xf32>
    %517 = vector.shape_cast %516 : vector<1x8x32xf32> to vector<8x32xf32>
    %518 = vector.shape_cast %444 : vector<8x32xf32> to vector<1x8x32xf32>
    tpu.vector_store %arg9[%c0_93, %c0_94, %c0_95], %518 {strides = array<i32>} : memref<2x8x32xf32, #tpu.memory_space<vmem>>, vector<1x8x32xf32>,
    %c1 = arith.constant 1 : index
    %c0_96 = arith.constant 0 : index
    %c0_97 = arith.constant 0 : index
    %519 = vector.load %arg8[%c1, %c0_96, %c0_97] : memref<2x8x32xf32, #tpu.memory_space<vmem>>, vector<1x8x32xf32>
    %520 = vector.shape_cast %519 : vector<1x8x32xf32> to vector<8x32xf32>
    %521 = vector.shape_cast %503 : vector<8x32xf32> to vector<1x8x32xf32>
    tpu.vector_store %arg8[%c1, %c0_96, %c0_97], %521 {strides = array<i32>} : memref<2x8x32xf32, #tpu.memory_space<vmem>>, vector<1x8x32xf32>,
    %c1_98 = arith.constant 1 : index
    %c0_99 = arith.constant 0 : index
    %c0_100 = arith.constant 0 : index
    %522 = vector.load %arg9[%c1_98, %c0_99, %c0_100] : memref<2x8x32xf32, #tpu.memory_space<vmem>>, vector<1x8x32xf32>
    %523 = vector.shape_cast %522 : vector<1x8x32xf32> to vector<8x32xf32>
    %524 = vector.shape_cast %506 : vector<8x32xf32> to vector<1x8x32xf32>
    tpu.vector_store %arg9[%c1_98, %c0_99, %c0_100], %524 {strides = array<i32>} : memref<2x8x32xf32, #tpu.memory_space<vmem>>, vector<1x8x32xf32>,
    return
  }
}

</mosaic_0001>

<llo_original>
// kernel: encoder_forward.1
$region0: #{encoder_forward.1}
  #allocation0 [shape = 'u32[]', space=smem, size = 0x4, offset = 0x4, fixed_abs, tag = 'smem constant byte address 0x4 - core index']
  #allocation1 [shape = 'u32[144,128]{1,0:T(1,128)}', space=vmem, size = 0x12000, scoped, tag = 'internal scratch']
  %s0 = inlined_call_operand.vmem [shape: s32[64,1], index: 0, kind: input, shape index: {}]
  %s1 = inlined_call_operand.vmem [shape: s32[8,1], index: 1, kind: input, shape index: {}]
  %s2 = inlined_call_operand.hbm [shape: f32[50,128], index: 2, kind: input, shape index: {}]
  %s3 = inlined_call_operand.vmem [shape: f32[1,128], index: 3, kind: input, shape index: {}]
  %s4 = inlined_call_operand.vmem [shape: f32[32,128], index: 4, kind: input, shape index: {}]
  %s5 = inlined_call_operand.vmem [shape: f32[64,128], index: 5, kind: input, shape index: {}]
  %s6 = inlined_call_operand.vmem [shape: f32[1,128], index: 6, kind: input, shape index: {}]
  %s7 = inlined_call_operand.vmem [shape: f32[8,256], index: 7, kind: output, shape index: {0}]
  %s8 = inlined_call_operand.hbm [shape: f32[2,8,32], index: 8, kind: output, shape index: {1}]
  %s9 = inlined_call_operand.hbm [shape: f32[2,8,32], index: 9, kind: output, shape index: {2}]
  %10 = xla_tuple %s7, %s8, %s9
  %s11 = sld [smem:[#allocation0]]
  $region58: #{encoder_forward.1} parent=0
    _
  %s13 = ssub.s32 1, %s11
  %s14 = scalar_select 0, %s13, %s11
  $region1: #{encoder_forward.1} parent=0
    #allocation2 [shape = 'u8[28672]{0}', space=vmem, size = 0x7000, scoped, tag = 'input window, operand 2, single buffered']
    #allocation3 [shape = 's32[1]{0}', space=sflag, size = 0x4, scoped, tag = 'scoped memory for encoder_forward.1']
    #allocation4 [shape = 's32[1]{0}', space=sflag, size = 0x4, scoped, tag = 'scoped memory for encoder_forward.1']
    #allocation5 [shape = 'u8[8192]{0}', space=vmem, size = 0x2000, scoped, tag = 'output window, operand 1, single buffered']
    #allocation6 [shape = 'u8[8192]{0}', space=vmem, size = 0x2000, scoped, tag = 'output window, operand 2, single buffered']
    #allocation7 [shape = 's32[1]{0}', space=sflag, size = 0x4, scoped, tag = 'scoped memory for encoder_forward.1']
    %15 = vsyncpa [#allocation3], 0
    %16 = vsyncpa [#allocation4], 0
    %17 = vsyncpa [#allocation7], 0
    // Predicated region
    $region2: #{encoder_forward.1} parent=1 // pred_check
      _
    $region3: #{encoder_forward.1} parent=1 // pred_check_branch
      %19 = sbr.rel (0) target = $region5
    $region4: #{encoder_forward.1} parent=1 // pred_region
      _
    $region5: #{encoder_forward.1} parent=1 // pred_fallthru
      _
    // Predicated region
    $region6: #{encoder_forward.1} parent=1 // pred_check
      _
    $region7: #{encoder_forward.1} parent=1 // pred_check_branch
      %21 = sbr.rel (0) target = $region9
    $region8: #{encoder_forward.1} parent=1 // pred_region
      _
    $region9: #{encoder_forward.1} parent=1 // pred_fallthru
      _
    // Predicated region
    $region10: #{encoder_forward.1} parent=1 // pred_check
      _
    $region11: #{encoder_forward.1} parent=1 // pred_check_branch
      %23 = sbr.rel (0) target = $region13
    $region12: #{encoder_forward.1} parent=1 // pred_region
      %s25 = ssub.s32 896, 896
      %26 = vsyncadd [#allocation3], %s25
      %s27 = sshll.u32 [#allocation2], 4
      %s28 = int_to_ptr.vmem [resolvable:$true] %s27
      %33 = dma.hbm_to_vmem [thread:$0]  %s2, 896, %s28, [#allocation3], 128, 128, 8
    $region13: #{encoder_forward.1} parent=1 // pred_fallthru
      _
    // Predicated region
    $region14: #{encoder_forward.1} parent=1 // pred_check
      _
    $region15: #{encoder_forward.1} parent=1 // pred_check_branch
      %35 = sbr.rel (0) target = $region17
    $region16: #{encoder_forward.1} parent=1 // pred_region
      _
    $region17: #{encoder_forward.1} parent=1 // pred_fallthru
      _
    // Predicated region
    $region18: #{encoder_forward.1} parent=1 // pred_check
      _
    $region19: #{encoder_forward.1} parent=1 // pred_check_branch
      %37 = sbr.rel (0) target = $region21
    $region20: #{encoder_forward.1} parent=1 // pred_region
      _
    $region21: #{encoder_forward.1} parent=1 // pred_fallthru
      _
    // Predicated region
    $region22: #{encoder_forward.1} parent=1 // pred_check
      _
    $region23: #{encoder_forward.1} parent=1 // pred_check_branch
      %39 = sbr.rel (0) target = $region25
    $region24: #{encoder_forward.1} parent=1 // pred_region
      _
    $region25: #{encoder_forward.1} parent=1 // pred_fallthru
      _
    // Predicated region
    $region26: #{encoder_forward.1} parent=1 // pred_check
      _
    $region27: #{encoder_forward.1} parent=1 // pred_check_branch
      %41 = sbr.rel (0) target = $region29
    $region28: #{encoder_forward.1} parent=1 // pred_region
      _
    $region29: #{encoder_forward.1} parent=1 // pred_fallthru
      _
    // Predicated region
    $region30: #{encoder_forward.1} parent=1 // pred_check
      _
    $region31: #{encoder_forward.1} parent=1 // pred_check_branch
      %43 = sbr.rel (0) target = $region33
    $region32: #{encoder_forward.1} parent=1 // pred_region
      %44 = dma.done [#allocation3], 896
    $region33: #{encoder_forward.1} parent=1 // pred_fallthru
      _
    %v45 = vld [vmem:[%s1] sm:$0xff]
    %v46 = vlaneseq
    %v47 = vand.u32 %v46, 127
    %vm48 = vcmp.ge.s32.totalorder %v47, 64
    %vm49 = vcmp.lt.s32.totalorder %v47, 96
    %vm50 = vmand %vm48, %vm49
    %v51 = vld [vmem:[%s0] sm:$0xff]
    %v52 = vld [vmem:[%s0 + $0x8] sm:$0xff]
    %v53 = vld [vmem:[%s0 + $0x10] sm:$0xff]
    %v54 = vld [vmem:[%s0 + $0x18] sm:$0xff]
    %v55 = vld [vmem:[%s0 + $0x20] sm:$0xff]
    %v56 = vld [vmem:[%s0 + $0x28] sm:$0xff]
    %v57 = vld [vmem:[%s0 + $0x30] sm:$0xff]
    %v58 = vld [vmem:[%s0 + $0x38] sm:$0xff]
    %59 = vset.pattern.permute.xlu0 0
    %60 = vperm.xlu0 %59, %v51
    %v61 = vpop.permute.xlu0 %60
    %62 = vset.pattern.permute.xlu0 0
    %63 = vperm.xlu0 %62, %v52
    %v64 = vpop.permute.xlu0 %63
    %65 = vset.pattern.permute.xlu0 0
    %66 = vperm.xlu0 %65, %v53
    %v67 = vpop.permute.xlu0 %66
    %68 = vset.pattern.permute.xlu0 0
    %69 = vperm.xlu0 %68, %v54
    %v70 = vpop.permute.xlu0 %69
    %71 = vset.pattern.permute.xlu0 0
    %72 = vperm.xlu0 %71, %v55
    %v73 = vpop.permute.xlu0 %72
    %74 = vset.pattern.permute.xlu0 0
    %75 = vperm.xlu0 %74, %v56
    %v76 = vpop.permute.xlu0 %75
    %77 = vset.pattern.permute.xlu0 0
    %78 = vperm.xlu0 %77, %v57
    %v79 = vpop.permute.xlu0 %78
    %80 = vset.pattern.permute.xlu0 0
    %81 = vperm.xlu0 %80, %v58
    %v82 = vpop.permute.xlu0 %81
    %vm83 = vcmp.eq.s32.totalorder %v47, %v61
    %vm84 = vcmp.eq.s32.totalorder %v47, %v64
    %vm85 = vcmp.eq.s32.totalorder %v47, %v67
    %vm86 = vcmp.eq.s32.totalorder %v47, %v70
    %vm87 = vcmp.eq.s32.totalorder %v47, %v73
    %vm88 = vcmp.eq.s32.totalorder %v47, %v76
    %vm89 = vcmp.eq.s32.totalorder %v47, %v79
    %vm90 = vcmp.eq.s32.totalorder %v47, %v82
    %v91 = vsel %vm83, 1, 0
    %v92 = vsel %vm84, 1, 0
    %v93 = vsel %vm85, 1, 0
    %v94 = vsel %vm86, 1, 0
    %v95 = vsel %vm87, 1, 0
    %v96 = vsel %vm88, 1, 0
    %v97 = vsel %vm89, 1, 0
    %v98 = vsel %vm90, 1, 0
    %v99 = vcvt.s32.f32 %v91
    %v100 = vcvt.s32.f32 %v92
    %v101 = vcvt.s32.f32 %v93
    %v102 = vcvt.s32.f32 %v94
    %v103 = vcvt.s32.f32 %v95
    %v104 = vcvt.s32.f32 %v96
    %v105 = vcvt.s32.f32 %v97
    %v106 = vcvt.s32.f32 %v98
    %v107 = vld [vmem:[#allocation2] sm:$0xff]
    %v108 = vld [vmem:[#allocation2 + $0x8] sm:$0xff]
    %v109 = vld [vmem:[#allocation2 + $0x10] sm:$0xff]
    %v110 = vld [vmem:[#allocation2 + $0x18] sm:$0xff]
    %v111 = vld [vmem:[#allocation2 + $0x20] sm:$0xff]
    %v112 = vld [vmem:[#allocation2 + $0x28] sm:$0xff]
    %v113 = vld [vmem:[#allocation2 + $0x30] sm:$0x3]
    %v114 = vld [vmem:[%s3] sm:$0x1]
    %v116 = vlaneseq
    %v117 = vshrl.u32 %v116, 7
    %v118 = vsub.s32 0, %v117
    %v119 = vrot.slane %v114, %v118
    %vm121 = vcmask 408576
    %v123 = vsel %vm121, %v99, 0
    %v126 = vsel %vm121, %v100, 0
    %v129 = vsel %vm121, %v101, 0
    %v132 = vsel %vm121, %v102, 0
    %v135 = vsel %vm121, %v103, 0
    %v138 = vsel %vm121, %v104, 0
    %v141 = vsel %vm121, %v105, 0
    %v144 = vsel %vm121, %v106, 0
    %vm146 = vcmask 1041408
    %v148 = vsel %vm146, %v113, 0
    %150 = vmatprep.subr.mxu0 0.0
    %151 = vmatpush1.msra.mxu0 0.0
    %152 = vmatprep.subr.mxu0 0.0
    %153 = vmatpush1.msra.mxu0 0.0
    %154 = vmatprep.subr.mxu0 0.0
    %155 = vmatpush1.msra.mxu0 0.0
    %156 = vmatprep.subr.mxu0 0.0
    %157 = vmatpush1.msra.mxu0 0.0
    %158 = vmatprep.subr.mxu0 0.0
    %159 = vmatpush1.msra.mxu0 0.0
    %160 = vmatprep.subr.mxu0 0.0
    %161 = vmatpush1.msra.mxu0 0.0
    %162 = vmatprep.subr.mxu0 0.0
    %163 = vmatpush1.msra.mxu0 0.0
    %164 = vmatprep.subr.mxu0 0.0
    %165 = vmatpush1.msra.mxu0 0.0
    %166 = vmatprep.subr.mxu0 0.0
    %167 = vmatpush1.msra.mxu0 0.0
    %168 = vmatprep.subr.mxu0 0.0
    %169 = vmatpush1.msra.mxu0 %v148
    %170 = vmatprep.subr.mxu0 0.0
    %171 = vmatpush1.msra.mxu0 %v112
    %172 = vmatprep.subr.mxu0 0.0
    %173 = vmatpush1.msra.mxu0 %v111
    %174 = vmatprep.subr.mxu0 0.0
    %175 = vmatpush1.msra.mxu0 %v110
    %176 = vmatprep.subr.mxu0 0.0
    %177 = vmatpush1.msra.mxu0 %v109
    %178 = vmatprep.subr.mxu0 0.0
    %179 = vmatpush1.msra.mxu0 %v108
    %180 = vmatprep.subr.mxu0 0.0
    %181 = vmatpush1.msra.mxu0 %v107
    %182 = vmatprep.subr.mxu0 0.0
    %183 = vmatpush2.msra.mxu0 0.0
    %184 = vmatprep.subr.mxu0 0.0
    %185 = vmatpush2.msra.mxu0 0.0
    %186 = vmatprep.subr.mxu0 0.0
    %187 = vmatpush2.msra.mxu0 0.0
    %188 = vmatprep.subr.mxu0 0.0
    %189 = vmatpush2.msra.mxu0 0.0
    %190 = vmatprep.subr.mxu0 0.0
    %191 = vmatpush2.msra.mxu0 0.0
    %192 = vmatprep.subr.mxu0 0.0
    %193 = vmatpush2.msra.mxu0 0.0
    %194 = vmatprep.subr.mxu0 0.0
    %195 = vmatpush2.msra.mxu0 0.0
    %196 = vmatprep.subr.mxu0 0.0
    %197 = vmatpush2.msra.mxu0 0.0
    %198 = vmatprep.subr.mxu0 0.0
    %199 = vmatpush2.msra.mxu0 0.0
    %200 = vmatprep.subr.mxu0 0.0
    %201 = vmatpush2.msra.mxu0 0.0
    %202 = vmatprep.subr.mxu0 0.0
    %203 = vmatpush2.msra.mxu0 0.0
    %204 = vmatprep.subr.mxu0 0.0
    %205 = vmatpush2.msra.mxu0 0.0
    %206 = vmatprep.subr.mxu0 0.0
    %207 = vmatpush2.msra.mxu0 0.0
    %208 = vmatprep.subr.mxu0 0.0
    %209 = vmatpush2.msra.mxu0 0.0
    %210 = vmatprep.subr.mxu0 0.0
    %211 = vmatpush2.msra.mxu0 0.0
    %212 = vmatprep.subr.mxu0 0.0
    %213 = vmatpush2.msra.mxu0 0.0
    %214 = vmatprep.mubr.f32.mxu0 0.0
    %215 = vmatmul.mubr.f32.gmra.mxu0 %v123
    %v216 = vpop.f32.mrf.mxu0
    %v217 = vadd.f32 %v119, %v216
    %v218 = vpop.f32.mrf.mxu0
    %219 = vmatprep.mubr.f32.mxu0 0.0
    %220 = vmatmul.mubr.f32.gmra.mxu0 %v126
    %v221 = vpop.f32.mrf.mxu0
    %v222 = vadd.f32 %v119, %v221
    %v223 = vpop.f32.mrf.mxu0
    %224 = vmatprep.mubr.f32.mxu0 0.0
    %225 = vmatmul.mubr.f32.gmra.mxu0 %v129
    %v226 = vpop.f32.mrf.mxu0
    %v227 = vadd.f32 %v119, %v226
    %v228 = vpop.f32.mrf.mxu0
    %229 = vmatprep.mubr.f32.mxu0 0.0
    %230 = vmatmul.mubr.f32.gmra.mxu0 %v132
    %v231 = vpop.f32.mrf.mxu0
    %v232 = vadd.f32 %v119, %v231
    %v233 = vpop.f32.mrf.mxu0
    %234 = vmatprep.mubr.f32.mxu0 0.0
    %235 = vmatmul.mubr.f32.gmra.mxu0 %v135
    %v236 = vpop.f32.mrf.mxu0
    %v237 = vadd.f32 %v119, %v236
    %v238 = vpop.f32.mrf.mxu0
    %239 = vmatprep.mubr.f32.mxu0 0.0
    %240 = vmatmul.mubr.f32.gmra.mxu0 %v138
    %v241 = vpop.f32.mrf.mxu0
    %v242 = vadd.f32 %v119, %v241
    %v243 = vpop.f32.mrf.mxu0
    %244 = vmatprep.mubr.f32.mxu0 0.0
    %245 = vmatmul.mubr.f32.gmra.mxu0 %v141
    %v246 = vpop.f32.mrf.mxu0
    %v247 = vadd.f32 %v119, %v246
    %v248 = vpop.f32.mrf.mxu0
    %249 = vmatprep.mubr.f32.mxu0 0.0
    %250 = vmatmul.mubr.f32.gmra.mxu0 %v144
    %v251 = vpop.f32.mrf.mxu0
    %v252 = vadd.f32 %v119, %v251
    %v253 = vpop.f32.mrf.mxu0
    %254 = vdwg.mxu0
    %v255 = vld [vmem:[%s4] sm:$0xff]
    %v256 = vld [vmem:[%s4 + $0x8] sm:$0xff]
    %v257 = vld [vmem:[%s4 + $0x10] sm:$0xff]
    %v258 = vld [vmem:[%s4 + $0x18] sm:$0xff]
    %v259 = vld [vmem:[%s5] sm:$0xff]
    %v260 = vld [vmem:[%s5 + $0x8] sm:$0xff]
    %v261 = vld [vmem:[%s5 + $0x10] sm:$0xff]
    %v262 = vld [vmem:[%s5 + $0x18] sm:$0xff]
    %v263 = vld [vmem:[%s5 + $0x20] sm:$0xff]
    %v264 = vld [vmem:[%s5 + $0x28] sm:$0xff]
    %v265 = vld [vmem:[%s5 + $0x30] sm:$0xff]
    %v266 = vld [vmem:[%s5 + $0x38] sm:$0xff]
    %v267 = vld [vmem:[%s6] sm:$0x1]
    %v268 = vtanh.pop %v217
    %v269 = vmul.f32 %v268, 0.5
    %v270 = vadd.f32 %v269, 0.5
    %v271 = vsel %vm50, %v268, %v270
    %v272 = vmul.f32 %v271, 0.0
    %274 = vrot.lane.b32.xlu0 %v271, 64
    %v275 = vpop.permute.xlu0 %274
    %v277 = vmul.f32 %v271, %v275
    %279 = vrot.lane.b32.xlu0 %v277, 32
    %v280 = vpop.permute.xlu0 %279
    %v282 = vadd.f32 %v272, %v280
    %v283 = vtanh.pop %v282
    %285 = vrot.lane.b32.xlu0 %v283, 64
    %v286 = vpop.permute.xlu0 %285
    %v288 = vmul.f32 %v271, %v286
    %vm289 = vcmp.gt.s32.totalorder %v45, 0
    %v290 = vsel %vm289, 1, 0
    %291 = vset.pattern.permute.xlu0 0
    %292 = vperm.xlu0 %291, %v290
    %v293 = vpop.permute.xlu0 %292
    %vm294 = vcmp.eq.s32.totalorder %v293, 1
    %v295 = vsel %vm294, %v288, 0.0
    %v296 = vsel %vm294, %v282, 0.0
    %298 = vrot.lane.b32.xlu0 %v295, 32
    %v299 = vpop.permute.xlu0 %298
    %vm300 = vcmask 261120
    %v301 = vsel %vm300, %v299, 0
    %303 = vmatprep.subr.mxu0 0.0
    %304 = vmatpush1.msra.mxu0 0.0
    %305 = vmatprep.subr.mxu0 0.0
    %306 = vmatpush1.msra.mxu0 0.0
    %307 = vmatprep.subr.mxu0 0.0
    %308 = vmatpush1.msra.mxu0 0.0
    %309 = vmatprep.subr.mxu0 0.0
    %310 = vmatpush1.msra.mxu0 0.0
    %311 = vmatprep.subr.mxu0 0.0
    %312 = vmatpush1.msra.mxu0 0.0
    %313 = vmatprep.subr.mxu0 0.0
    %314 = vmatpush1.msra.mxu0 0.0
    %315 = vmatprep.subr.mxu0 0.0
    %316 = vmatpush1.msra.mxu0 0.0
    %317 = vmatprep.subr.mxu0 0.0
    %318 = vmatpush1.msra.mxu0 0.0
    %319 = vmatprep.subr.mxu0 0.0
    %320 = vmatpush1.msra.mxu0 0.0
    %321 = vmatprep.subr.mxu0 0.0
    %322 = vmatpush1.msra.mxu0 0.0
    %323 = vmatprep.subr.mxu0 0.0
    %324 = vmatpush1.msra.mxu0 0.0
    %325 = vmatprep.subr.mxu0 0.0
    %326 = vmatpush1.msra.mxu0 0.0
    %327 = vmatprep.subr.mxu0 0.0
    %328 = vmatpush1.msra.mxu0 %v258
    %329 = vmatprep.subr.mxu0 0.0
    %330 = vmatpush1.msra.mxu0 %v257
    %331 = vmatprep.subr.mxu0 0.0
    %332 = vmatpush1.msra.mxu0 %v256
    %333 = vmatprep.subr.mxu0 0.0
    %334 = vmatpush1.msra.mxu0 %v255
    %335 = vmatprep.subr.mxu0 0.0
    %336 = vmatpush2.msra.mxu0 0.0
    %337 = vmatprep.subr.mxu0 0.0
    %338 = vmatpush2.msra.mxu0 0.0
    %339 = vmatprep.subr.mxu0 0.0
    %340 = vmatpush2.msra.mxu0 0.0
    %341 = vmatprep.subr.mxu0 0.0
    %342 = vmatpush2.msra.mxu0 0.0
    %343 = vmatprep.subr.mxu0 0.0
    %344 = vmatpush2.msra.mxu0 0.0
    %345 = vmatprep.subr.mxu0 0.0
    %346 = vmatpush2.msra.mxu0 0.0
    %347 = vmatprep.subr.mxu0 0.0
    %348 = vmatpush2.msra.mxu0 0.0
    %349 = vmatprep.subr.mxu0 0.0
    %350 = vmatpush2.msra.mxu0 0.0
    %351 = vmatprep.subr.mxu0 0.0
    %352 = vmatpush2.msra.mxu0 0.0
    %353 = vmatprep.subr.mxu0 0.0
    %354 = vmatpush2.msra.mxu0 0.0
    %355 = vmatprep.subr.mxu0 0.0
    %356 = vmatpush2.msra.mxu0 0.0
    %357 = vmatprep.subr.mxu0 0.0
    %358 = vmatpush2.msra.mxu0 0.0
    %359 = vmatprep.subr.mxu0 0.0
    %360 = vmatpush2.msra.mxu0 0.0
    %361 = vmatprep.subr.mxu0 0.0
    %362 = vmatpush2.msra.mxu0 0.0
    %363 = vmatprep.subr.mxu0 0.0
    %364 = vmatpush2.msra.mxu0 0.0
    %365 = vmatprep.subr.mxu0 0.0
    %366 = vmatpush2.msra.mxu0 0.0
    %367 = vmatprep.mubr.f32.mxu0 0.0
    %368 = vmatmul.mubr.f32.gmra.mxu0 %v301
    %v369 = vpop.f32.mrf.mxu0
    %v370 = vadd.f32 0.0, %v369
    %v371 = vpop.f32.mrf.mxu0
    %372 = vdwg.mxu0
    %v373 = vadd.f32 %v222, %v370
    %v374 = vtanh.pop %v373
    %v375 = vmul.f32 %v374, 0.5
    %v376 = vadd.f32 %v375, 0.5
    %v377 = vsel %vm50, %v374, %v376
    %v378 = vmul.f32 %v377, %v296
    %380 = vrot.lane.b32.xlu0 %v377, 64
    %v381 = vpop.permute.xlu0 %380
    %v383 = vmul.f32 %v377, %v381
    %385 = vrot.lane.b32.xlu0 %v383, 32
    %v386 = vpop.permute.xlu0 %385
    %v388 = vadd.f32 %v378, %v386
    %v389 = vtanh.pop %v388
    %391 = vrot.lane.b32.xlu0 %v389, 64
    %v392 = vpop.permute.xlu0 %391
    %v394 = vmul.f32 %v377, %v392
    %vm395 = vcmp.gt.s32.totalorder %v45, 1
    %v396 = vsel %vm395, 1, 0
    %397 = vset.pattern.permute.xlu0 0
    %398 = vperm.xlu0 %397, %v396
    %v399 = vpop.permute.xlu0 %398
    %vm400 = vcmp.eq.s32.totalorder %v399, 1
    %v401 = vsel %vm400, %v394, %v295
    %v402 = vsel %vm400, %v388, %v296
    %v403 = vsel %vm400, %v394, 0.0
    %v405 = vsel %vm300, %v299, 0.0
    %v407 = vlaneseq
    %v408 = vshrl.u32 %v407, 7
    %v409 = vsub.s32 0, %v408
    %v410 = vrot.slane %v267, %v409
    %vm412 = vcmask 523264
    %v414 = vsel %vm412, %v405, 0
    %416 = vmatprep.subr.mxu0 0.0
    %417 = vmatpush1.msra.mxu0 0.0
    %418 = vmatprep.subr.mxu0 0.0
    %419 = vmatpush1.msra.mxu0 0.0
    %420 = vmatprep.subr.mxu0 0.0
    %421 = vmatpush1.msra.mxu0 0.0
    %422 = vmatprep.subr.mxu0 0.0
    %423 = vmatpush1.msra.mxu0 0.0
    %424 = vmatprep.subr.mxu0 0.0
    %425 = vmatpush1.msra.mxu0 0.0
    %426 = vmatprep.subr.mxu0 0.0
    %427 = vmatpush1.msra.mxu0 0.0
    %428 = vmatprep.subr.mxu0 0.0
    %429 = vmatpush1.msra.mxu0 0.0
    %430 = vmatprep.subr.mxu0 0.0
    %431 = vmatpush1.msra.mxu0 0.0
    %432 = vmatprep.subr.mxu0 0.0
    %433 = vmatpush1.msra.mxu0 %v266
    %434 = vmatprep.subr.mxu0 0.0
    %435 = vmatpush1.msra.mxu0 %v265
    %436 = vmatprep.subr.mxu0 0.0
    %437 = vmatpush1.msra.mxu0 %v264
    %438 = vmatprep.subr.mxu0 0.0
    %439 = vmatpush1.msra.mxu0 %v263
    %440 = vmatprep.subr.mxu0 0.0
    %441 = vmatpush1.msra.mxu0 %v262
    %442 = vmatprep.subr.mxu0 0.0
    %443 = vmatpush1.msra.mxu0 %v261
    %444 = vmatprep.subr.mxu0 0.0
    %445 = vmatpush1.msra.mxu0 %v260
    %446 = vmatprep.subr.mxu0 0.0
    %447 = vmatpush1.msra.mxu0 %v259
    %448 = vmatprep.subr.mxu0 0.0
    %449 = vmatpush2.msra.mxu0 0.0
    %450 = vmatprep.subr.mxu0 0.0
    %451 = vmatpush2.msra.mxu0 0.0
    %452 = vmatprep.subr.mxu0 0.0
    %453 = vmatpush2.msra.mxu0 0.0
    %454 = vmatprep.subr.mxu0 0.0
    %455 = vmatpush2.msra.mxu0 0.0
    %456 = vmatprep.subr.mxu0 0.0
    %457 = vmatpush2.msra.mxu0 0.0
    %458 = vmatprep.subr.mxu0 0.0
    %459 = vmatpush2.msra.mxu0 0.0
    %460 = vmatprep.subr.mxu0 0.0
    %461 = vmatpush2.msra.mxu0 0.0
    %462 = vmatprep.subr.mxu0 0.0
    %463 = vmatpush2.msra.mxu0 0.0
    %464 = vmatprep.subr.mxu0 0.0
    %465 = vmatpush2.msra.mxu0 0.0
    %466 = vmatprep.subr.mxu0 0.0
    %467 = vmatpush2.msra.mxu0 0.0
    %468 = vmatprep.subr.mxu0 0.0
    %469 = vmatpush2.msra.mxu0 0.0
    %470 = vmatprep.subr.mxu0 0.0
    %471 = vmatpush2.msra.mxu0 0.0
    %472 = vmatprep.subr.mxu0 0.0
    %473 = vmatpush2.msra.mxu0 0.0
    %474 = vmatprep.subr.mxu0 0.0
    %475 = vmatpush2.msra.mxu0 0.0
    %476 = vmatprep.subr.mxu0 0.0
    %477 = vmatpush2.msra.mxu0 0.0
    %478 = vmatprep.subr.mxu0 0.0
    %479 = vmatpush2.msra.mxu0 0.0
    %480 = vmatprep.mubr.f32.mxu0 0.0
    %481 = vmatmul.mubr.f32.gmra.mxu0 %v414
    %v482 = vpop.f32.mrf.mxu0
    %v483 = vadd.f32 %v410, %v482
    %v484 = vpop.f32.mrf.mxu0
    %485 = vdwg.mxu0
    %v486 = vtanh.pop %v483
    %v487 = vmul.f32 %v486, 0.5
    %v488 = vadd.f32 %v487, 0.5
    %v489 = vsel %vm50, %v486, %v488
    %v490 = vmul.f32 %v489, 0.0
    %492 = vrot.lane.b32.xlu0 %v489, 64
    %v493 = vpop.permute.xlu0 %492
    %v495 = vmul.f32 %v489, %v493
    %497 = vrot.lane.b32.xlu0 %v495, 32
    %v498 = vpop.permute.xlu0 %497
    %v500 = vadd.f32 %v490, %v498
    %v501 = vtanh.pop %v500
    %503 = vrot.lane.b32.xlu0 %v501, 64
    %v504 = vpop.permute.xlu0 %503
    %v506 = vmul.f32 %v489, %v504
    %v507 = vsel %vm294, %v506, 0.0
    %v508 = vsel %vm294, %v500, 0.0
    %510 = vrot.lane.b32.xlu0 %v401, 32
    %v511 = vpop.permute.xlu0 %510
    %v512 = vsel %vm300, %v511, 0
    %514 = vmatprep.subr.mxu0 0.0
    %515 = vmatpush1.msra.mxu0 0.0
    %516 = vmatprep.subr.mxu0 0.0
    %517 = vmatpush1.msra.mxu0 0.0
    %518 = vmatprep.subr.mxu0 0.0
    %519 = vmatpush1.msra.mxu0 0.0
    %520 = vmatprep.subr.mxu0 0.0
    %521 = vmatpush1.msra.mxu0 0.0
    %522 = vmatprep.subr.mxu0 0.0
    %523 = vmatpush1.msra.mxu0 0.0
    %524 = vmatprep.subr.mxu0 0.0
    %525 = vmatpush1.msra.mxu0 0.0
    %526 = vmatprep.subr.mxu0 0.0
    %527 = vmatpush1.msra.mxu0 0.0
    %528 = vmatprep.subr.mxu0 0.0
    %529 = vmatpush1.msra.mxu0 0.0
    %530 = vmatprep.subr.mxu0 0.0
    %531 = vmatpush1.msra.mxu0 0.0
    %532 = vmatprep.subr.mxu0 0.0
    %533 = vmatpush1.msra.mxu0 0.0
    %534 = vmatprep.subr.mxu0 0.0
    %535 = vmatpush1.msra.mxu0 0.0
    %536 = vmatprep.subr.mxu0 0.0
    %537 = vmatpush1.msra.mxu0 0.0
    %538 = vmatprep.subr.mxu0 0.0
    %539 = vmatpush1.msra.mxu0 %v258
    %540 = vmatprep.subr.mxu0 0.0
    %541 = vmatpush1.msra.mxu0 %v257
    %542 = vmatprep.subr.mxu0 0.0
    %543 = vmatpush1.msra.mxu0 %v256
    %544 = vmatprep.subr.mxu0 0.0
    %545 = vmatpush1.msra.mxu0 %v255
    %546 = vmatprep.subr.mxu0 0.0
    %547 = vmatpush2.msra.mxu0 0.0
    %548 = vmatprep.subr.mxu0 0.0
    %549 = vmatpush2.msra.mxu0 0.0
    %550 = vmatprep.subr.mxu0 0.0
    %551 = vmatpush2.msra.mxu0 0.0
    %552 = vmatprep.subr.mxu0 0.0
    %553 = vmatpush2.msra.mxu0 0.0
    %554 = vmatprep.subr.mxu0 0.0
    %555 = vmatpush2.msra.mxu0 0.0
    %556 = vmatprep.subr.mxu0 0.0
    %557 = vmatpush2.msra.mxu0 0.0
    %558 = vmatprep.subr.mxu0 0.0
    %559 = vmatpush2.msra.mxu0 0.0
    %560 = vmatprep.subr.mxu0 0.0
    %561 = vmatpush2.msra.mxu0 0.0
    %562 = vmatprep.subr.mxu0 0.0
    %563 = vmatpush2.msra.mxu0 0.0
    %564 = vmatprep.subr.mxu0 0.0
    %565 = vmatpush2.msra.mxu0 0.0
    %566 = vmatprep.subr.mxu0 0.0
    %567 = vmatpush2.msra.mxu0 0.0
    %568 = vmatprep.subr.mxu0 0.0
    %569 = vmatpush2.msra.mxu0 0.0
    %570 = vmatprep.subr.mxu0 0.0
    %571 = vmatpush2.msra.mxu0 0.0
    %572 = vmatprep.subr.mxu0 0.0
    %573 = vmatpush2.msra.mxu0 0.0
    %574 = vmatprep.subr.mxu0 0.0
    %575 = vmatpush2.msra.mxu0 0.0
    %576 = vmatprep.subr.mxu0 0.0
    %577 = vmatpush2.msra.mxu0 0.0
    %578 = vmatprep.mubr.f32.mxu0 0.0
    %579 = vmatmul.mubr.f32.gmra.mxu0 %v512
    %v580 = vpop.f32.mrf.mxu0
    %v581 = vadd.f32 0.0, %v580
    %v582 = vpop.f32.mrf.mxu0
    %583 = vdwg.mxu0
    %v584 = vadd.f32 %v227, %v581
    %v585 = vtanh.pop %v584
    %v586 = vmul.f32 %v585, 0.5
    %v587 = vadd.f32 %v586, 0.5
    %v588 = vsel %vm50, %v585, %v587
    %v589 = vmul.f32 %v588, %v402
    %591 = vrot.lane.b32.xlu0 %v588, 64
    %v592 = vpop.permute.xlu0 %591
    %v594 = vmul.f32 %v588, %v592
    %596 = vrot.lane.b32.xlu0 %v594, 32
    %v597 = vpop.permute.xlu0 %596
    %v599 = vadd.f32 %v589, %v597
    %v600 = vtanh.pop %v599
    %602 = vrot.lane.b32.xlu0 %v600, 64
    %v603 = vpop.permute.xlu0 %602
    %v605 = vmul.f32 %v588, %v603
    %vm606 = vcmp.gt.s32.totalorder %v45, 2
    %v607 = vsel %vm606, 1, 0
    %608 = vset.pattern.permute.xlu0 0
    %609 = vperm.xlu0 %608, %v607
    %v610 = vpop.permute.xlu0 %609
    %vm611 = vcmp.eq.s32.totalorder %v610, 1
    %v612 = vsel %vm611, %v605, %v401
    %v613 = vsel %vm611, %v599, %v402
    %v614 = vsel %vm611, %v605, 0.0
    %616 = vrot.lane.b32.xlu0 %v403, 32
    %v617 = vpop.permute.xlu0 %616
    %620 = vrot.lane.b32.xlu0 %v507, 64
    %v621 = vpop.permute.xlu0 %620
    %v623 = vsel %vm300, %v617, %v621
    %v625 = vsel %vm412, %v623, 0
    %627 = vmatprep.subr.mxu0 0.0
    %628 = vmatpush1.msra.mxu0 0.0
    %629 = vmatprep.subr.mxu0 0.0
    %630 = vmatpush1.msra.mxu0 0.0
    %631 = vmatprep.subr.mxu0 0.0
    %632 = vmatpush1.msra.mxu0 0.0
    %633 = vmatprep.subr.mxu0 0.0
    %634 = vmatpush1.msra.mxu0 0.0
    %635 = vmatprep.subr.mxu0 0.0
    %636 = vmatpush1.msra.mxu0 0.0
    %637 = vmatprep.subr.mxu0 0.0
    %638 = vmatpush1.msra.mxu0 0.0
    %639 = vmatprep.subr.mxu0 0.0
    %640 = vmatpush1.msra.mxu0 0.0
    %641 = vmatprep.subr.mxu0 0.0
    %642 = vmatpush1.msra.mxu0 0.0
    %643 = vmatprep.subr.mxu0 0.0
    %644 = vmatpush1.msra.mxu0 %v266
    %645 = vmatprep.subr.mxu0 0.0
    %646 = vmatpush1.msra.mxu0 %v265
    %647 = vmatprep.subr.mxu0 0.0
    %648 = vmatpush1.msra.mxu0 %v264
    %649 = vmatprep.subr.mxu0 0.0
    %650 = vmatpush1.msra.mxu0 %v263
    %651 = vmatprep.subr.mxu0 0.0
    %652 = vmatpush1.msra.mxu0 %v262
    %653 = vmatprep.subr.mxu0 0.0
    %654 = vmatpush1.msra.mxu0 %v261
    %655 = vmatprep.subr.mxu0 0.0
    %656 = vmatpush1.msra.mxu0 %v260
    %657 = vmatprep.subr.mxu0 0.0
    %658 = vmatpush1.msra.mxu0 %v259
    %659 = vmatprep.subr.mxu0 0.0
    %660 = vmatpush2.msra.mxu0 0.0
    %661 = vmatprep.subr.mxu0 0.0
    %662 = vmatpush2.msra.mxu0 0.0
    %663 = vmatprep.subr.mxu0 0.0
    %664 = vmatpush2.msra.mxu0 0.0
    %665 = vmatprep.subr.mxu0 0.0
    %666 = vmatpush2.msra.mxu0 0.0
    %667 = vmatprep.subr.mxu0 0.0
    %668 = vmatpush2.msra.mxu0 0.0
    %669 = vmatprep.subr.mxu0 0.0
    %670 = vmatpush2.msra.mxu0 0.0
    %671 = vmatprep.subr.mxu0 0.0
    %672 = vmatpush2.msra.mxu0 0.0
    %673 = vmatprep.subr.mxu0 0.0
    %674 = vmatpush2.msra.mxu0 0.0
    %675 = vmatprep.subr.mxu0 0.0
    %676 = vmatpush2.msra.mxu0 0.0
    %677 = vmatprep.subr.mxu0 0.0
    %678 = vmatpush2.msra.mxu0 0.0
    %679 = vmatprep.subr.mxu0 0.0
    %680 = vmatpush2.msra.mxu0 0.0
    %681 = vmatprep.subr.mxu0 0.0
    %682 = vmatpush2.msra.mxu0 0.0
    %683 = vmatprep.subr.mxu0 0.0
    %684 = vmatpush2.msra.mxu0 0.0
    %685 = vmatprep.subr.mxu0 0.0
    %686 = vmatpush2.msra.mxu0 0.0
    %687 = vmatprep.subr.mxu0 0.0
    %688 = vmatpush2.msra.mxu0 0.0
    %689 = vmatprep.subr.mxu0 0.0
    %690 = vmatpush2.msra.mxu0 0.0
    %691 = vmatprep.mubr.f32.mxu0 0.0
    %692 = vmatmul.mubr.f32.gmra.mxu0 %v625
    %v693 = vpop.f32.mrf.mxu0
    %v694 = vadd.f32 %v410, %v693
    %v695 = vpop.f32.mrf.mxu0
    %696 = vdwg.mxu0
    %v697 = vtanh.pop %v694
    %v698 = vmul.f32 %v697, 0.5
    %v699 = vadd.f32 %v698, 0.5
    %v700 = vsel %vm50, %v697, %v699
    %v701 = vmul.f32 %v700, %v508
    %703 = vrot.lane.b32.xlu0 %v700, 64
    %v704 = vpop.permute.xlu0 %703
    %v706 = vmul.f32 %v700, %v704
    %708 = vrot.lane.b32.xlu0 %v706, 32
    %v709 = vpop.permute.xlu0 %708
    %v711 = vadd.f32 %v701, %v709
    %v712 = vtanh.pop %v711
    %714 = vrot.lane.b32.xlu0 %v712, 64
    %v715 = vpop.permute.xlu0 %714
    %v717 = vmul.f32 %v700, %v715
    %v718 = vsel %vm400, %v717, %v507
    %v719 = vsel %vm400, %v711, %v508
    %v720 = vsel %vm400, %v717, 0.0
    %722 = vrot.lane.b32.xlu0 %v612, 32
    %v723 = vpop.permute.xlu0 %722
    %v724 = vsel %vm300, %v723, 0
    %726 = vmatprep.subr.mxu0 0.0
    %727 = vmatpush1.msra.mxu0 0.0
    %728 = vmatprep.subr.mxu0 0.0
    %729 = vmatpush1.msra.mxu0 0.0
    %730 = vmatprep.subr.mxu0 0.0
    %731 = vmatpush1.msra.mxu0 0.0
    %732 = vmatprep.subr.mxu0 0.0
    %733 = vmatpush1.msra.mxu0 0.0
    %734 = vmatprep.subr.mxu0 0.0
    %735 = vmatpush1.msra.mxu0 0.0
    %736 = vmatprep.subr.mxu0 0.0
    %737 = vmatpush1.msra.mxu0 0.0
    %738 = vmatprep.subr.mxu0 0.0
    %739 = vmatpush1.msra.mxu0 0.0
    %740 = vmatprep.subr.mxu0 0.0
    %741 = vmatpush1.msra.mxu0 0.0
    %742 = vmatprep.subr.mxu0 0.0
    %743 = vmatpush1.msra.mxu0 0.0
    %744 = vmatprep.subr.mxu0 0.0
    %745 = vmatpush1.msra.mxu0 0.0
    %746 = vmatprep.subr.mxu0 0.0
    %747 = vmatpush1.msra.mxu0 0.0
    %748 = vmatprep.subr.mxu0 0.0
    %749 = vmatpush1.msra.mxu0 0.0
    %750 = vmatprep.subr.mxu0 0.0
    %751 = vmatpush1.msra.mxu0 %v258
    %752 = vmatprep.subr.mxu0 0.0
    %753 = vmatpush1.msra.mxu0 %v257
    %754 = vmatprep.subr.mxu0 0.0
    %755 = vmatpush1.msra.mxu0 %v256
    %756 = vmatprep.subr.mxu0 0.0
    %757 = vmatpush1.msra.mxu0 %v255
    %758 = vmatprep.subr.mxu0 0.0
    %759 = vmatpush2.msra.mxu0 0.0
    %760 = vmatprep.subr.mxu0 0.0
    %761 = vmatpush2.msra.mxu0 0.0
    %762 = vmatprep.subr.mxu0 0.0
    %763 = vmatpush2.msra.mxu0 0.0
    %764 = vmatprep.subr.mxu0 0.0
    %765 = vmatpush2.msra.mxu0 0.0
    %766 = vmatprep.subr.mxu0 0.0
    %767 = vmatpush2.msra.mxu0 0.0
    %768 = vmatprep.subr.mxu0 0.0
    %769 = vmatpush2.msra.mxu0 0.0
    %770 = vmatprep.subr.mxu0 0.0
    %771 = vmatpush2.msra.mxu0 0.0
    %772 = vmatprep.subr.mxu0 0.0
    %773 = vmatpush2.msra.mxu0 0.0
    %774 = vmatprep.subr.mxu0 0.0
    %775 = vmatpush2.msra.mxu0 0.0
    %776 = vmatprep.subr.mxu0 0.0
    %777 = vmatpush2.msra.mxu0 0.0
    %778 = vmatprep.subr.mxu0 0.0
    %779 = vmatpush2.msra.mxu0 0.0
    %780 = vmatprep.subr.mxu0 0.0
    %781 = vmatpush2.msra.mxu0 0.0
    %782 = vmatprep.subr.mxu0 0.0
    %783 = vmatpush2.msra.mxu0 0.0
    %784 = vmatprep.subr.mxu0 0.0
    %785 = vmatpush2.msra.mxu0 0.0
    %786 = vmatprep.subr.mxu0 0.0
    %787 = vmatpush2.msra.mxu0 0.0
    %788 = vmatprep.subr.mxu0 0.0
    %789 = vmatpush2.msra.mxu0 0.0
    %790 = vmatprep.mubr.f32.mxu0 0.0
    %791 = vmatmul.mubr.f32.gmra.mxu0 %v724
    %v792 = vpop.f32.mrf.mxu0
    %v793 = vadd.f32 0.0, %v792
    %v794 = vpop.f32.mrf.mxu0
    %795 = vdwg.mxu0
    %v796 = vadd.f32 %v232, %v793
    %v797 = vtanh.pop %v796
    %v798 = vmul.f32 %v797, 0.5
    %v799 = vadd.f32 %v798, 0.5
    %v800 = vsel %vm50, %v797, %v799
    %v801 = vmul.f32 %v800, %v613
    %803 = vrot.lane.b32.xlu0 %v800, 64
    %v804 = vpop.permute.xlu0 %803
    %v806 = vmul.f32 %v800, %v804
    %808 = vrot.lane.b32.xlu0 %v806, 32
    %v809 = vpop.permute.xlu0 %808
    %v811 = vadd.f32 %v801, %v809
    %v812 = vtanh.pop %v811
    %814 = vrot.lane.b32.xlu0 %v812, 64
    %v815 = vpop.permute.xlu0 %814
    %v817 = vmul.f32 %v800, %v815
    %vm818 = vcmp.gt.s32.totalorder %v45, 3
    %v819 = vsel %vm818, 1, 0
    %820 = vset.pattern.permute.xlu0 0
    %821 = vperm.xlu0 %820, %v819
    %v822 = vpop.permute.xlu0 %821
    %vm823 = vcmp.eq.s32.totalorder %v822, 1
    %v824 = vsel %vm823, %v817, %v612
    %v825 = vsel %vm823, %v811, %v613
    %v826 = vsel %vm823, %v817, 0.0
    %828 = vrot.lane.b32.xlu0 %v614, 32
    %v829 = vpop.permute.xlu0 %828
    %832 = vrot.lane.b32.xlu0 %v718, 64
    %v833 = vpop.permute.xlu0 %832
    %v835 = vsel %vm300, %v829, %v833
    %v837 = vsel %vm412, %v835, 0
    %839 = vmatprep.subr.mxu0 0.0
    %840 = vmatpush1.msra.mxu0 0.0
    %841 = vmatprep.subr.mxu0 0.0
    %842 = vmatpush1.msra.mxu0 0.0
    %843 = vmatprep.subr.mxu0 0.0
    %844 = vmatpush1.msra.mxu0 0.0
    %845 = vmatprep.subr.mxu0 0.0
    %846 = vmatpush1.msra.mxu0 0.0
    %847 = vmatprep.subr.mxu0 0.0
    %848 = vmatpush1.msra.mxu0 0.0
    %849 = vmatprep.subr.mxu0 0.0
    %850 = vmatpush1.msra.mxu0 0.0
    %851 = vmatprep.subr.mxu0 0.0
    %852 = vmatpush1.msra.mxu0 0.0
    %853 = vmatprep.subr.mxu0 0.0
    %854 = vmatpush1.msra.mxu0 0.0
    %855 = vmatprep.subr.mxu0 0.0
    %856 = vmatpush1.msra.mxu0 %v266
    %857 = vmatprep.subr.mxu0 0.0
    %858 = vmatpush1.msra.mxu0 %v265
    %859 = vmatprep.subr.mxu0 0.0
    %860 = vmatpush1.msra.mxu0 %v264
    %861 = vmatprep.subr.mxu0 0.0
    %862 = vmatpush1.msra.mxu0 %v263
    %863 = vmatprep.subr.mxu0 0.0
    %864 = vmatpush1.msra.mxu0 %v262
    %865 = vmatprep.subr.mxu0 0.0
    %866 = vmatpush1.msra.mxu0 %v261
    %867 = vmatprep.subr.mxu0 0.0
    %868 = vmatpush1.msra.mxu0 %v260
    %869 = vmatprep.subr.mxu0 0.0
    %870 = vmatpush1.msra.mxu0 %v259
    %871 = vmatprep.subr.mxu0 0.0
    %872 = vmatpush2.msra.mxu0 0.0
    %873 = vmatprep.subr.mxu0 0.0
    %874 = vmatpush2.msra.mxu0 0.0
    %875 = vmatprep.subr.mxu0 0.0
    %876 = vmatpush2.msra.mxu0 0.0
    %877 = vmatprep.subr.mxu0 0.0
    %878 = vmatpush2.msra.mxu0 0.0
    %879 = vmatprep.subr.mxu0 0.0
    %880 = vmatpush2.msra.mxu0 0.0
    %881 = vmatprep.subr.mxu0 0.0
    %882 = vmatpush2.msra.mxu0 0.0
    %883 = vmatprep.subr.mxu0 0.0
    %884 = vmatpush2.msra.mxu0 0.0
    %885 = vmatprep.subr.mxu0 0.0
    %886 = vmatpush2.msra.mxu0 0.0
    %887 = vmatprep.subr.mxu0 0.0
    %888 = vmatpush2.msra.mxu0 0.0
    %889 = vmatprep.subr.mxu0 0.0
    %890 = vmatpush2.msra.mxu0 0.0
    %891 = vmatprep.subr.mxu0 0.0
    %892 = vmatpush2.msra.mxu0 0.0
    %893 = vmatprep.subr.mxu0 0.0
    %894 = vmatpush2.msra.mxu0 0.0
    %895 = vmatprep.subr.mxu0 0.0
    %896 = vmatpush2.msra.mxu0 0.0
    %897 = vmatprep.subr.mxu0 0.0
    %898 = vmatpush2.msra.mxu0 0.0
    %899 = vmatprep.subr.mxu0 0.0
    %900 = vmatpush2.msra.mxu0 0.0
    %901 = vmatprep.subr.mxu0 0.0
    %902 = vmatpush2.msra.mxu0 0.0
    %903 = vmatprep.mubr.f32.mxu0 0.0
    %904 = vmatmul.mubr.f32.gmra.mxu0 %v837
    %v905 = vpop.f32.mrf.mxu0
    %v906 = vadd.f32 %v410, %v905
    %v907 = vpop.f32.mrf.mxu0
    %908 = vdwg.mxu0
    %v909 = vtanh.pop %v906
    %v910 = vmul.f32 %v909, 0.5
    %v911 = vadd.f32 %v910, 0.5
    %v912 = vsel %vm50, %v909, %v911
    %v913 = vmul.f32 %v912, %v719
    %915 = vrot.lane.b32.xlu0 %v912, 64
    %v916 = vpop.permute.xlu0 %915
    %v918 = vmul.f32 %v912, %v916
    %920 = vrot.lane.b32.xlu0 %v918, 32
    %v921 = vpop.permute.xlu0 %920
    %v923 = vadd.f32 %v913, %v921
    %v924 = vtanh.pop %v923
    %926 = vrot.lane.b32.xlu0 %v924, 64
    %v927 = vpop.permute.xlu0 %926
    %v929 = vmul.f32 %v912, %v927
    %v930 = vsel %vm611, %v929, %v718
    %v931 = vsel %vm611, %v923, %v719
    %v932 = vsel %vm611, %v929, 0.0
    %934 = vrot.lane.b32.xlu0 %v824, 32
    %v935 = vpop.permute.xlu0 %934
    %v936 = vsel %vm300, %v935, 0
    %938 = vmatprep.subr.mxu0 0.0
    %939 = vmatpush1.msra.mxu0 0.0
    %940 = vmatprep.subr.mxu0 0.0
    %941 = vmatpush1.msra.mxu0 0.0
    %942 = vmatprep.subr.mxu0 0.0
    %943 = vmatpush1.msra.mxu0 0.0
    %944 = vmatprep.subr.mxu0 0.0
    %945 = vmatpush1.msra.mxu0 0.0
    %946 = vmatprep.subr.mxu0 0.0
    %947 = vmatpush1.msra.mxu0 0.0
    %948 = vmatprep.subr.mxu0 0.0
    %949 = vmatpush1.msra.mxu0 0.0
    %950 = vmatprep.subr.mxu0 0.0
    %951 = vmatpush1.msra.mxu0 0.0
    %952 = vmatprep.subr.mxu0 0.0
    %953 = vmatpush1.msra.mxu0 0.0
    %954 = vmatprep.subr.mxu0 0.0
    %955 = vmatpush1.msra.mxu0 0.0
    %956 = vmatprep.subr.mxu0 0.0
    %957 = vmatpush1.msra.mxu0 0.0
    %958 = vmatprep.subr.mxu0 0.0
    %959 = vmatpush1.msra.mxu0 0.0
    %960 = vmatprep.subr.mxu0 0.0
    %961 = vmatpush1.msra.mxu0 0.0
    %962 = vmatprep.subr.mxu0 0.0
    %963 = vmatpush1.msra.mxu0 %v258
    %964 = vmatprep.subr.mxu0 0.0
    %965 = vmatpush1.msra.mxu0 %v257
    %966 = vmatprep.subr.mxu0 0.0
    %967 = vmatpush1.msra.mxu0 %v256
    %968 = vmatprep.subr.mxu0 0.0
    %969 = vmatpush1.msra.mxu0 %v255
    %970 = vmatprep.subr.mxu0 0.0
    %971 = vmatpush2.msra.mxu0 0.0
    %972 = vmatprep.subr.mxu0 0.0
    %973 = vmatpush2.msra.mxu0 0.0
    %974 = vmatprep.subr.mxu0 0.0
    %975 = vmatpush2.msra.mxu0 0.0
    %976 = vmatprep.subr.mxu0 0.0
    %977 = vmatpush2.msra.mxu0 0.0
    %978 = vmatprep.subr.mxu0 0.0
    %979 = vmatpush2.msra.mxu0 0.0
    %980 = vmatprep.subr.mxu0 0.0
    %981 = vmatpush2.msra.mxu0 0.0
    %982 = vmatprep.subr.mxu0 0.0
    %983 = vmatpush2.msra.mxu0 0.0
    %984 = vmatprep.subr.mxu0 0.0
    %985 = vmatpush2.msra.mxu0 0.0
    %986 = vmatprep.subr.mxu0 0.0
    %987 = vmatpush2.msra.mxu0 0.0
    %988 = vmatprep.subr.mxu0 0.0
    %989 = vmatpush2.msra.mxu0 0.0
    %990 = vmatprep.subr.mxu0 0.0
    %991 = vmatpush2.msra.mxu0 0.0
    %992 = vmatprep.subr.mxu0 0.0
    %993 = vmatpush2.msra.mxu0 0.0
    %994 = vmatprep.subr.mxu0 0.0
    %995 = vmatpush2.msra.mxu0 0.0
    %996 = vmatprep.subr.mxu0 0.0
    %997 = vmatpush2.msra.mxu0 0.0
    %998 = vmatprep.subr.mxu0 0.0
    %999 = vmatpush2.msra.mxu0 0.0
    %1000 = vmatprep.subr.mxu0 0.0
    %1001 = vmatpush2.msra.mxu0 0.0
    %1002 = vmatprep.mubr.f32.mxu0 0.0
    %1003 = vmatmul.mubr.f32.gmra.mxu0 %v936
    %v1004 = vpop.f32.mrf.mxu0
    %v1005 = vadd.f32 0.0, %v1004
    %v1006 = vpop.f32.mrf.mxu0
    %1007 = vdwg.mxu0
    %v1008 = vadd.f32 %v237, %v1005
    %v1009 = vtanh.pop %v1008
    %v1010 = vmul.f32 %v1009, 0.5
    %v1011 = vadd.f32 %v1010, 0.5
    %v1012 = vsel %vm50, %v1009, %v1011
    %v1013 = vmul.f32 %v1012, %v825
    %1015 = vrot.lane.b32.xlu0 %v1012, 64
    %v1016 = vpop.permute.xlu0 %1015
    %v1018 = vmul.f32 %v1012, %v1016
    %1020 = vrot.lane.b32.xlu0 %v1018, 32
    %v1021 = vpop.permute.xlu0 %1020
    %v1023 = vadd.f32 %v1013, %v1021
    %v1024 = vtanh.pop %v1023
    %1026 = vrot.lane.b32.xlu0 %v1024, 64
    %v1027 = vpop.permute.xlu0 %1026
    %v1029 = vmul.f32 %v1012, %v1027
    %vm1030 = vcmp.gt.s32.totalorder %v45, 4
    %v1031 = vsel %vm1030, 1, 0
    %1032 = vset.pattern.permute.xlu0 0
    %1033 = vperm.xlu0 %1032, %v1031
    %v1034 = vpop.permute.xlu0 %1033
    %vm1035 = vcmp.eq.s32.totalorder %v1034, 1
    %v1036 = vsel %vm1035, %v1029, %v824
    %v1037 = vsel %vm1035, %v1023, %v825
    %v1038 = vsel %vm1035, %v1029, 0.0
    %1040 = vrot.lane.b32.xlu0 %v826, 32
    %v1041 = vpop.permute.xlu0 %1040
    %1044 = vrot.lane.b32.xlu0 %v930, 64
    %v1045 = vpop.permute.xlu0 %1044
    %v1047 = vsel %vm300, %v1041, %v1045
    %v1049 = vsel %vm412, %v1047, 0
    %1051 = vmatprep.subr.mxu0 0.0
    %1052 = vmatpush1.msra.mxu0 0.0
    %1053 = vmatprep.subr.mxu0 0.0
    %1054 = vmatpush1.msra.mxu0 0.0
    %1055 = vmatprep.subr.mxu0 0.0
    %1056 = vmatpush1.msra.mxu0 0.0
    %1057 = vmatprep.subr.mxu0 0.0
    %1058 = vmatpush1.msra.mxu0 0.0
    %1059 = vmatprep.subr.mxu0 0.0
    %1060 = vmatpush1.msra.mxu0 0.0
    %1061 = vmatprep.subr.mxu0 0.0
    %1062 = vmatpush1.msra.mxu0 0.0
    %1063 = vmatprep.subr.mxu0 0.0
    %1064 = vmatpush1.msra.mxu0 0.0
    %1065 = vmatprep.subr.mxu0 0.0
    %1066 = vmatpush1.msra.mxu0 0.0
    %1067 = vmatprep.subr.mxu0 0.0
    %1068 = vmatpush1.msra.mxu0 %v266
    %1069 = vmatprep.subr.mxu0 0.0
    %1070 = vmatpush1.msra.mxu0 %v265
    %1071 = vmatprep.subr.mxu0 0.0
    %1072 = vmatpush1.msra.mxu0 %v264
    %1073 = vmatprep.subr.mxu0 0.0
    %1074 = vmatpush1.msra.mxu0 %v263
    %1075 = vmatprep.subr.mxu0 0.0
    %1076 = vmatpush1.msra.mxu0 %v262
    %1077 = vmatprep.subr.mxu0 0.0
    %1078 = vmatpush1.msra.mxu0 %v261
    %1079 = vmatprep.subr.mxu0 0.0
    %1080 = vmatpush1.msra.mxu0 %v260
    %1081 = vmatprep.subr.mxu0 0.0
    %1082 = vmatpush1.msra.mxu0 %v259
    %1083 = vmatprep.subr.mxu0 0.0
    %1084 = vmatpush2.msra.mxu0 0.0
    %1085 = vmatprep.subr.mxu0 0.0
    %1086 = vmatpush2.msra.mxu0 0.0
    %1087 = vmatprep.subr.mxu0 0.0
    %1088 = vmatpush2.msra.mxu0 0.0
    %1089 = vmatprep.subr.mxu0 0.0
    %1090 = vmatpush2.msra.mxu0 0.0
    %1091 = vmatprep.subr.mxu0 0.0
    %1092 = vmatpush2.msra.mxu0 0.0
    %1093 = vmatprep.subr.mxu0 0.0
    %1094 = vmatpush2.msra.mxu0 0.0
    %1095 = vmatprep.subr.mxu0 0.0
    %1096 = vmatpush2.msra.mxu0 0.0
    %1097 = vmatprep.subr.mxu0 0.0
    %1098 = vmatpush2.msra.mxu0 0.0
    %1099 = vmatprep.subr.mxu0 0.0
    %1100 = vmatpush2.msra.mxu0 0.0
    %1101 = vmatprep.subr.mxu0 0.0
    %1102 = vmatpush2.msra.mxu0 0.0
    %1103 = vmatprep.subr.mxu0 0.0
    %1104 = vmatpush2.msra.mxu0 0.0
    %1105 = vmatprep.subr.mxu0 0.0
    %1106 = vmatpush2.msra.mxu0 0.0
    %1107 = vmatprep.subr.mxu0 0.0
    %1108 = vmatpush2.msra.mxu0 0.0
    %1109 = vmatprep.subr.mxu0 0.0
    %1110 = vmatpush2.msra.mxu0 0.0
    %1111 = vmatprep.subr.mxu0 0.0
    %1112 = vmatpush2.msra.mxu0 0.0
    %1113 = vmatprep.subr.mxu0 0.0
    %1114 = vmatpush2.msra.mxu0 0.0
    %1115 = vmatprep.mubr.f32.mxu0 0.0
    %1116 = vmatmul.mubr.f32.gmra.mxu0 %v1049
    %v1117 = vpop.f32.mrf.mxu0
    %v1118 = vadd.f32 %v410, %v1117
    %v1119 = vpop.f32.mrf.mxu0
    %1120 = vdwg.mxu0
    %v1121 = vtanh.pop %v1118
    %v1122 = vmul.f32 %v1121, 0.5
    %v1123 = vadd.f32 %v1122, 0.5
    %v1124 = vsel %vm50, %v1121, %v1123
    %v1125 = vmul.f32 %v1124, %v931
    %1127 = vrot.lane.b32.xlu0 %v1124, 64
    %v1128 = vpop.permute.xlu0 %1127
    %v1130 = vmul.f32 %v1124, %v1128
    %1132 = vrot.lane.b32.xlu0 %v1130, 32
    %v1133 = vpop.permute.xlu0 %1132
    %v1135 = vadd.f32 %v1125, %v1133
    %v1136 = vtanh.pop %v1135
    %1138 = vrot.lane.b32.xlu0 %v1136, 64
    %v1139 = vpop.permute.xlu0 %1138
    %v1141 = vmul.f32 %v1124, %v1139
    %v1142 = vsel %vm823, %v1141, %v930
    %v1143 = vsel %vm823, %v1135, %v931
    %v1144 = vsel %vm823, %v1141, 0.0
    %1146 = vrot.lane.b32.xlu0 %v1036, 32
    %v1147 = vpop.permute.xlu0 %1146
    %v1148 = vsel %vm300, %v1147, 0
    %1150 = vmatprep.subr.mxu0 0.0
    %1151 = vmatpush1.msra.mxu0 0.0
    %1152 = vmatprep.subr.mxu0 0.0
    %1153 = vmatpush1.msra.mxu0 0.0
    %1154 = vmatprep.subr.mxu0 0.0
    %1155 = vmatpush1.msra.mxu0 0.0
    %1156 = vmatprep.subr.mxu0 0.0
    %1157 = vmatpush1.msra.mxu0 0.0
    %1158 = vmatprep.subr.mxu0 0.0
    %1159 = vmatpush1.msra.mxu0 0.0
    %1160 = vmatprep.subr.mxu0 0.0
    %1161 = vmatpush1.msra.mxu0 0.0
    %1162 = vmatprep.subr.mxu0 0.0
    %1163 = vmatpush1.msra.mxu0 0.0
    %1164 = vmatprep.subr.mxu0 0.0
    %1165 = vmatpush1.msra.mxu0 0.0
    %1166 = vmatprep.subr.mxu0 0.0
    %1167 = vmatpush1.msra.mxu0 0.0
    %1168 = vmatprep.subr.mxu0 0.0
    %1169 = vmatpush1.msra.mxu0 0.0
    %1170 = vmatprep.subr.mxu0 0.0
    %1171 = vmatpush1.msra.mxu0 0.0
    %1172 = vmatprep.subr.mxu0 0.0
    %1173 = vmatpush1.msra.mxu0 0.0
    %1174 = vmatprep.subr.mxu0 0.0
    %1175 = vmatpush1.msra.mxu0 %v258
    %1176 = vmatprep.subr.mxu0 0.0
    %1177 = vmatpush1.msra.mxu0 %v257
    %1178 = vmatprep.subr.mxu0 0.0
    %1179 = vmatpush1.msra.mxu0 %v256
    %1180 = vmatprep.subr.mxu0 0.0
    %1181 = vmatpush1.msra.mxu0 %v255
    %1182 = vmatprep.subr.mxu0 0.0
    %1183 = vmatpush2.msra.mxu0 0.0
    %1184 = vmatprep.subr.mxu0 0.0
    %1185 = vmatpush2.msra.mxu0 0.0
    %1186 = vmatprep.subr.mxu0 0.0
    %1187 = vmatpush2.msra.mxu0 0.0
    %1188 = vmatprep.subr.mxu0 0.0
    %1189 = vmatpush2.msra.mxu0 0.0
    %1190 = vmatprep.subr.mxu0 0.0
    %1191 = vmatpush2.msra.mxu0 0.0
    %1192 = vmatprep.subr.mxu0 0.0
    %1193 = vmatpush2.msra.mxu0 0.0
    %1194 = vmatprep.subr.mxu0 0.0
    %1195 = vmatpush2.msra.mxu0 0.0
    %1196 = vmatprep.subr.mxu0 0.0
    %1197 = vmatpush2.msra.mxu0 0.0
    %1198 = vmatprep.subr.mxu0 0.0
    %1199 = vmatpush2.msra.mxu0 0.0
    %1200 = vmatprep.subr.mxu0 0.0
    %1201 = vmatpush2.msra.mxu0 0.0
    %1202 = vmatprep.subr.mxu0 0.0
    %1203 = vmatpush2.msra.mxu0 0.0
    %1204 = vmatprep.subr.mxu0 0.0
    %1205 = vmatpush2.msra.mxu0 0.0
    %1206 = vmatprep.subr.mxu0 0.0
    %1207 = vmatpush2.msra.mxu0 0.0
    %1208 = vmatprep.subr.mxu0 0.0
    %1209 = vmatpush2.msra.mxu0 0.0
    %1210 = vmatprep.subr.mxu0 0.0
    %1211 = vmatpush2.msra.mxu0 0.0
    %1212 = vmatprep.subr.mxu0 0.0
    %1213 = vmatpush2.msra.mxu0 0.0
    %1214 = vmatprep.mubr.f32.mxu0 0.0
    %1215 = vmatmul.mubr.f32.gmra.mxu0 %v1148
    %v1216 = vpop.f32.mrf.mxu0
    %v1217 = vadd.f32 0.0, %v1216
    %v1218 = vpop.f32.mrf.mxu0
    %1219 = vdwg.mxu0
    %v1220 = vadd.f32 %v242, %v1217
    %v1221 = vtanh.pop %v1220
    %v1222 = vmul.f32 %v1221, 0.5
    %v1223 = vadd.f32 %v1222, 0.5
    %v1224 = vsel %vm50, %v1221, %v1223
    %v1225 = vmul.f32 %v1224, %v1037
    %1227 = vrot.lane.b32.xlu0 %v1224, 64
    %v1228 = vpop.permute.xlu0 %1227
    %v1230 = vmul.f32 %v1224, %v1228
    %1232 = vrot.lane.b32.xlu0 %v1230, 32
    %v1233 = vpop.permute.xlu0 %1232
    %v1235 = vadd.f32 %v1225, %v1233
    %v1236 = vtanh.pop %v1235
    %1238 = vrot.lane.b32.xlu0 %v1236, 64
    %v1239 = vpop.permute.xlu0 %1238
    %v1241 = vmul.f32 %v1224, %v1239
    %vm1242 = vcmp.gt.s32.totalorder %v45, 5
    %v1243 = vsel %vm1242, 1, 0
    %1244 = vset.pattern.permute.xlu0 0
    %1245 = vperm.xlu0 %1244, %v1243
    %v1246 = vpop.permute.xlu0 %1245
    %vm1247 = vcmp.eq.s32.totalorder %v1246, 1
    %v1248 = vsel %vm1247, %v1241, %v1036
    %v1249 = vsel %vm1247, %v1235, %v1037
    %v1250 = vsel %vm1247, %v1241, 0.0
    %1252 = vrot.lane.b32.xlu0 %v1038, 32
    %v1253 = vpop.permute.xlu0 %1252
    %1256 = vrot.lane.b32.xlu0 %v1142, 64
    %v1257 = vpop.permute.xlu0 %1256
    %v1259 = vsel %vm300, %v1253, %v1257
    %v1261 = vsel %vm412, %v1259, 0
    %1263 = vmatprep.subr.mxu0 0.0
    %1264 = vmatpush1.msra.mxu0 0.0
    %1265 = vmatprep.subr.mxu0 0.0
    %1266 = vmatpush1.msra.mxu0 0.0
    %1267 = vmatprep.subr.mxu0 0.0
    %1268 = vmatpush1.msra.mxu0 0.0
    %1269 = vmatprep.subr.mxu0 0.0
    %1270 = vmatpush1.msra.mxu0 0.0
    %1271 = vmatprep.subr.mxu0 0.0
    %1272 = vmatpush1.msra.mxu0 0.0
    %1273 = vmatprep.subr.mxu0 0.0
    %1274 = vmatpush1.msra.mxu0 0.0
    %1275 = vmatprep.subr.mxu0 0.0
    %1276 = vmatpush1.msra.mxu0 0.0
    %1277 = vmatprep.subr.mxu0 0.0
    %1278 = vmatpush1.msra.mxu0 0.0
    %1279 = vmatprep.subr.mxu0 0.0
    %1280 = vmatpush1.msra.mxu0 %v266
    %1281 = vmatprep.subr.mxu0 0.0
    %1282 = vmatpush1.msra.mxu0 %v265
    %1283 = vmatprep.subr.mxu0 0.0
    %1284 = vmatpush1.msra.mxu0 %v264
    %1285 = vmatprep.subr.mxu0 0.0
    %1286 = vmatpush1.msra.mxu0 %v263
    %1287 = vmatprep.subr.mxu0 0.0
    %1288 = vmatpush1.msra.mxu0 %v262
    %1289 = vmatprep.subr.mxu0 0.0
    %1290 = vmatpush1.msra.mxu0 %v261
    %1291 = vmatprep.subr.mxu0 0.0
    %1292 = vmatpush1.msra.mxu0 %v260
    %1293 = vmatprep.subr.mxu0 0.0
    %1294 = vmatpush1.msra.mxu0 %v259
    %1295 = vmatprep.subr.mxu0 0.0
    %1296 = vmatpush2.msra.mxu0 0.0
    %1297 = vmatprep.subr.mxu0 0.0
    %1298 = vmatpush2.msra.mxu0 0.0
    %1299 = vmatprep.subr.mxu0 0.0
    %1300 = vmatpush2.msra.mxu0 0.0
    %1301 = vmatprep.subr.mxu0 0.0
    %1302 = vmatpush2.msra.mxu0 0.0
    %1303 = vmatprep.subr.mxu0 0.0
    %1304 = vmatpush2.msra.mxu0 0.0
    %1305 = vmatprep.subr.mxu0 0.0
    %1306 = vmatpush2.msra.mxu0 0.0
    %1307 = vmatprep.subr.mxu0 0.0
    %1308 = vmatpush2.msra.mxu0 0.0
    %1309 = vmatprep.subr.mxu0 0.0
    %1310 = vmatpush2.msra.mxu0 0.0
    %1311 = vmatprep.subr.mxu0 0.0
    %1312 = vmatpush2.msra.mxu0 0.0
    %1313 = vmatprep.subr.mxu0 0.0
    %1314 = vmatpush2.msra.mxu0 0.0
    %1315 = vmatprep.subr.mxu0 0.0
    %1316 = vmatpush2.msra.mxu0 0.0
    %1317 = vmatprep.subr.mxu0 0.0
    %1318 = vmatpush2.msra.mxu0 0.0
    %1319 = vmatprep.subr.mxu0 0.0
    %1320 = vmatpush2.msra.mxu0 0.0
    %1321 = vmatprep.subr.mxu0 0.0
    %1322 = vmatpush2.msra.mxu0 0.0
    %1323 = vmatprep.subr.mxu0 0.0
    %1324 = vmatpush2.msra.mxu0 0.0
    %1325 = vmatprep.subr.mxu0 0.0
    %1326 = vmatpush2.msra.mxu0 0.0
    %1327 = vmatprep.mubr.f32.mxu0 0.0
    %1328 = vmatmul.mubr.f32.gmra.mxu0 %v1261
    %v1329 = vpop.f32.mrf.mxu0
    %v1330 = vadd.f32 %v410, %v1329
    %v1331 = vpop.f32.mrf.mxu0
    %1332 = vdwg.mxu0
    %v1333 = vtanh.pop %v1330
    %v1334 = vmul.f32 %v1333, 0.5
    %v1335 = vadd.f32 %v1334, 0.5
    %v1336 = vsel %vm50, %v1333, %v1335
    %v1337 = vmul.f32 %v1336, %v1143
    %1339 = vrot.lane.b32.xlu0 %v1336, 64
    %v1340 = vpop.permute.xlu0 %1339
    %v1342 = vmul.f32 %v1336, %v1340
    %1344 = vrot.lane.b32.xlu0 %v1342, 32
    %v1345 = vpop.permute.xlu0 %1344
    %v1347 = vadd.f32 %v1337, %v1345
    %v1348 = vtanh.pop %v1347
    %1350 = vrot.lane.b32.xlu0 %v1348, 64
    %v1351 = vpop.permute.xlu0 %1350
    %v1353 = vmul.f32 %v1336, %v1351
    %v1354 = vsel %vm1035, %v1353, %v1142
    %v1355 = vsel %vm1035, %v1347, %v1143
    %v1356 = vsel %vm1035, %v1353, 0.0
    %1358 = vrot.lane.b32.xlu0 %v1248, 32
    %v1359 = vpop.permute.xlu0 %1358
    %v1360 = vsel %vm300, %v1359, 0
    %1362 = vmatprep.subr.mxu0 0.0
    %1363 = vmatpush1.msra.mxu0 0.0
    %1364 = vmatprep.subr.mxu0 0.0
    %1365 = vmatpush1.msra.mxu0 0.0
    %1366 = vmatprep.subr.mxu0 0.0
    %1367 = vmatpush1.msra.mxu0 0.0
    %1368 = vmatprep.subr.mxu0 0.0
    %1369 = vmatpush1.msra.mxu0 0.0
    %1370 = vmatprep.subr.mxu0 0.0
    %1371 = vmatpush1.msra.mxu0 0.0
    %1372 = vmatprep.subr.mxu0 0.0
    %1373 = vmatpush1.msra.mxu0 0.0
    %1374 = vmatprep.subr.mxu0 0.0
    %1375 = vmatpush1.msra.mxu0 0.0
    %1376 = vmatprep.subr.mxu0 0.0
    %1377 = vmatpush1.msra.mxu0 0.0
    %1378 = vmatprep.subr.mxu0 0.0
    %1379 = vmatpush1.msra.mxu0 0.0
    %1380 = vmatprep.subr.mxu0 0.0
    %1381 = vmatpush1.msra.mxu0 0.0
    %1382 = vmatprep.subr.mxu0 0.0
    %1383 = vmatpush1.msra.mxu0 0.0
    %1384 = vmatprep.subr.mxu0 0.0
    %1385 = vmatpush1.msra.mxu0 0.0
    %1386 = vmatprep.subr.mxu0 0.0
    %1387 = vmatpush1.msra.mxu0 %v258
    %1388 = vmatprep.subr.mxu0 0.0
    %1389 = vmatpush1.msra.mxu0 %v257
    %1390 = vmatprep.subr.mxu0 0.0
    %1391 = vmatpush1.msra.mxu0 %v256
    %1392 = vmatprep.subr.mxu0 0.0
    %1393 = vmatpush1.msra.mxu0 %v255
    %1394 = vmatprep.subr.mxu0 0.0
    %1395 = vmatpush2.msra.mxu0 0.0
    %1396 = vmatprep.subr.mxu0 0.0
    %1397 = vmatpush2.msra.mxu0 0.0
    %1398 = vmatprep.subr.mxu0 0.0
    %1399 = vmatpush2.msra.mxu0 0.0
    %1400 = vmatprep.subr.mxu0 0.0
    %1401 = vmatpush2.msra.mxu0 0.0
    %1402 = vmatprep.subr.mxu0 0.0
    %1403 = vmatpush2.msra.mxu0 0.0
    %1404 = vmatprep.subr.mxu0 0.0
    %1405 = vmatpush2.msra.mxu0 0.0
    %1406 = vmatprep.subr.mxu0 0.0
    %1407 = vmatpush2.msra.mxu0 0.0
    %1408 = vmatprep.subr.mxu0 0.0
    %1409 = vmatpush2.msra.mxu0 0.0
    %1410 = vmatprep.subr.mxu0 0.0
    %1411 = vmatpush2.msra.mxu0 0.0
    %1412 = vmatprep.subr.mxu0 0.0
    %1413 = vmatpush2.msra.mxu0 0.0
    %1414 = vmatprep.subr.mxu0 0.0
    %1415 = vmatpush2.msra.mxu0 0.0
    %1416 = vmatprep.subr.mxu0 0.0
    %1417 = vmatpush2.msra.mxu0 0.0
    %1418 = vmatprep.subr.mxu0 0.0
    %1419 = vmatpush2.msra.mxu0 0.0
    %1420 = vmatprep.subr.mxu0 0.0
    %1421 = vmatpush2.msra.mxu0 0.0
    %1422 = vmatprep.subr.mxu0 0.0
    %1423 = vmatpush2.msra.mxu0 0.0
    %1424 = vmatprep.subr.mxu0 0.0
    %1425 = vmatpush2.msra.mxu0 0.0
    %1426 = vmatprep.mubr.f32.mxu0 0.0
    %1427 = vmatmul.mubr.f32.gmra.mxu0 %v1360
    %v1428 = vpop.f32.mrf.mxu0
    %v1429 = vadd.f32 0.0, %v1428
    %v1430 = vpop.f32.mrf.mxu0
    %1431 = vdwg.mxu0
    %v1432 = vadd.f32 %v247, %v1429
    %v1433 = vtanh.pop %v1432
    %v1434 = vmul.f32 %v1433, 0.5
    %v1435 = vadd.f32 %v1434, 0.5
    %v1436 = vsel %vm50, %v1433, %v1435
    %v1437 = vmul.f32 %v1436, %v1249
    %1439 = vrot.lane.b32.xlu0 %v1436, 64
    %v1440 = vpop.permute.xlu0 %1439
    %v1442 = vmul.f32 %v1436, %v1440
    %1444 = vrot.lane.b32.xlu0 %v1442, 32
    %v1445 = vpop.permute.xlu0 %1444
    %v1447 = vadd.f32 %v1437, %v1445
    %v1448 = vtanh.pop %v1447
    %1450 = vrot.lane.b32.xlu0 %v1448, 64
    %v1451 = vpop.permute.xlu0 %1450
    %v1453 = vmul.f32 %v1436, %v1451
    %vm1454 = vcmp.gt.s32.totalorder %v45, 6
    %v1455 = vsel %vm1454, 1, 0
    %1456 = vset.pattern.permute.xlu0 0
    %1457 = vperm.xlu0 %1456, %v1455
    %v1458 = vpop.permute.xlu0 %1457
    %vm1459 = vcmp.eq.s32.totalorder %v1458, 1
    %v1460 = vsel %vm1459, %v1453, %v1248
    %v1461 = vsel %vm1459, %v1447, %v1249
    %v1462 = vsel %vm1459, %v1453, 0.0
    %1464 = vrot.lane.b32.xlu0 %v1250, 32
    %v1465 = vpop.permute.xlu0 %1464
    %1468 = vrot.lane.b32.xlu0 %v1354, 64
    %v1469 = vpop.permute.xlu0 %1468
    %v1471 = vsel %vm300, %v1465, %v1469
    %v1473 = vsel %vm412, %v1471, 0
    %1475 = vmatprep.subr.mxu0 0.0
    %1476 = vmatpush1.msra.mxu0 0.0
    %1477 = vmatprep.subr.mxu0 0.0
    %1478 = vmatpush1.msra.mxu0 0.0
    %1479 = vmatprep.subr.mxu0 0.0
    %1480 = vmatpush1.msra.mxu0 0.0
    %1481 = vmatprep.subr.mxu0 0.0
    %1482 = vmatpush1.msra.mxu0 0.0
    %1483 = vmatprep.subr.mxu0 0.0
    %1484 = vmatpush1.msra.mxu0 0.0
    %1485 = vmatprep.subr.mxu0 0.0
    %1486 = vmatpush1.msra.mxu0 0.0
    %1487 = vmatprep.subr.mxu0 0.0
    %1488 = vmatpush1.msra.mxu0 0.0
    %1489 = vmatprep.subr.mxu0 0.0
    %1490 = vmatpush1.msra.mxu0 0.0
    %1491 = vmatprep.subr.mxu0 0.0
    %1492 = vmatpush1.msra.mxu0 %v266
    %1493 = vmatprep.subr.mxu0 0.0
    %1494 = vmatpush1.msra.mxu0 %v265
    %1495 = vmatprep.subr.mxu0 0.0
    %1496 = vmatpush1.msra.mxu0 %v264
    %1497 = vmatprep.subr.mxu0 0.0
    %1498 = vmatpush1.msra.mxu0 %v263
    %1499 = vmatprep.subr.mxu0 0.0
    %1500 = vmatpush1.msra.mxu0 %v262
    %1501 = vmatprep.subr.mxu0 0.0
    %1502 = vmatpush1.msra.mxu0 %v261
    %1503 = vmatprep.subr.mxu0 0.0
    %1504 = vmatpush1.msra.mxu0 %v260
    %1505 = vmatprep.subr.mxu0 0.0
    %1506 = vmatpush1.msra.mxu0 %v259
    %1507 = vmatprep.subr.mxu0 0.0
    %1508 = vmatpush2.msra.mxu0 0.0
    %1509 = vmatprep.subr.mxu0 0.0
    %1510 = vmatpush2.msra.mxu0 0.0
    %1511 = vmatprep.subr.mxu0 0.0
    %1512 = vmatpush2.msra.mxu0 0.0
    %1513 = vmatprep.subr.mxu0 0.0
    %1514 = vmatpush2.msra.mxu0 0.0
    %1515 = vmatprep.subr.mxu0 0.0
    %1516 = vmatpush2.msra.mxu0 0.0
    %1517 = vmatprep.subr.mxu0 0.0
    %1518 = vmatpush2.msra.mxu0 0.0
    %1519 = vmatprep.subr.mxu0 0.0
    %1520 = vmatpush2.msra.mxu0 0.0
    %1521 = vmatprep.subr.mxu0 0.0
    %1522 = vmatpush2.msra.mxu0 0.0
    %1523 = vmatprep.subr.mxu0 0.0
    %1524 = vmatpush2.msra.mxu0 0.0
    %1525 = vmatprep.subr.mxu0 0.0
    %1526 = vmatpush2.msra.mxu0 0.0
    %1527 = vmatprep.subr.mxu0 0.0
    %1528 = vmatpush2.msra.mxu0 0.0
    %1529 = vmatprep.subr.mxu0 0.0
    %1530 = vmatpush2.msra.mxu0 0.0
    %1531 = vmatprep.subr.mxu0 0.0
    %1532 = vmatpush2.msra.mxu0 0.0
    %1533 = vmatprep.subr.mxu0 0.0
    %1534 = vmatpush2.msra.mxu0 0.0
    %1535 = vmatprep.subr.mxu0 0.0
    %1536 = vmatpush2.msra.mxu0 0.0
    %1537 = vmatprep.subr.mxu0 0.0
    %1538 = vmatpush2.msra.mxu0 0.0
    %1539 = vmatprep.mubr.f32.mxu0 0.0
    %1540 = vmatmul.mubr.f32.gmra.mxu0 %v1473
    %v1541 = vpop.f32.mrf.mxu0
    %v1542 = vadd.f32 %v410, %v1541
    %v1543 = vpop.f32.mrf.mxu0
    %1544 = vdwg.mxu0
    %v1545 = vtanh.pop %v1542
    %v1546 = vmul.f32 %v1545, 0.5
    %v1547 = vadd.f32 %v1546, 0.5
    %v1548 = vsel %vm50, %v1545, %v1547
    %v1549 = vmul.f32 %v1548, %v1355
    %1551 = vrot.lane.b32.xlu0 %v1548, 64
    %v1552 = vpop.permute.xlu0 %1551
    %v1554 = vmul.f32 %v1548, %v1552
    %1556 = vrot.lane.b32.xlu0 %v1554, 32
    %v1557 = vpop.permute.xlu0 %1556
    %v1559 = vadd.f32 %v1549, %v1557
    %v1560 = vtanh.pop %v1559
    %1562 = vrot.lane.b32.xlu0 %v1560, 64
    %v1563 = vpop.permute.xlu0 %1562
    %v1565 = vmul.f32 %v1548, %v1563
    %v1566 = vsel %vm1247, %v1565, %v1354
    %v1567 = vsel %vm1247, %v1559, %v1355
    %v1568 = vsel %vm1247, %v1565, 0.0
    %1570 = vrot.lane.b32.xlu0 %v1460, 32
    %v1571 = vpop.permute.xlu0 %1570
    %v1572 = vsel %vm300, %v1571, 0
    %1574 = vmatprep.subr.mxu0 0.0
    %1575 = vmatpush1.msra.mxu0 0.0
    %1576 = vmatprep.subr.mxu0 0.0
    %1577 = vmatpush1.msra.mxu0 0.0
    %1578 = vmatprep.subr.mxu0 0.0
    %1579 = vmatpush1.msra.mxu0 0.0
    %1580 = vmatprep.subr.mxu0 0.0
    %1581 = vmatpush1.msra.mxu0 0.0
    %1582 = vmatprep.subr.mxu0 0.0
    %1583 = vmatpush1.msra.mxu0 0.0
    %1584 = vmatprep.subr.mxu0 0.0
    %1585 = vmatpush1.msra.mxu0 0.0
    %1586 = vmatprep.subr.mxu0 0.0
    %1587 = vmatpush1.msra.mxu0 0.0
    %1588 = vmatprep.subr.mxu0 0.0
    %1589 = vmatpush1.msra.mxu0 0.0
    %1590 = vmatprep.subr.mxu0 0.0
    %1591 = vmatpush1.msra.mxu0 0.0
    %1592 = vmatprep.subr.mxu0 0.0
    %1593 = vmatpush1.msra.mxu0 0.0
    %1594 = vmatprep.subr.mxu0 0.0
    %1595 = vmatpush1.msra.mxu0 0.0
    %1596 = vmatprep.subr.mxu0 0.0
    %1597 = vmatpush1.msra.mxu0 0.0
    %1598 = vmatprep.subr.mxu0 0.0
    %1599 = vmatpush1.msra.mxu0 %v258
    %1600 = vmatprep.subr.mxu0 0.0
    %1601 = vmatpush1.msra.mxu0 %v257
    %1602 = vmatprep.subr.mxu0 0.0
    %1603 = vmatpush1.msra.mxu0 %v256
    %1604 = vmatprep.subr.mxu0 0.0
    %1605 = vmatpush1.msra.mxu0 %v255
    %1606 = vmatprep.subr.mxu0 0.0
    %1607 = vmatpush2.msra.mxu0 0.0
    %1608 = vmatprep.subr.mxu0 0.0
    %1609 = vmatpush2.msra.mxu0 0.0
    %1610 = vmatprep.subr.mxu0 0.0
    %1611 = vmatpush2.msra.mxu0 0.0
    %1612 = vmatprep.subr.mxu0 0.0
    %1613 = vmatpush2.msra.mxu0 0.0
    %1614 = vmatprep.subr.mxu0 0.0
    %1615 = vmatpush2.msra.mxu0 0.0
    %1616 = vmatprep.subr.mxu0 0.0
    %1617 = vmatpush2.msra.mxu0 0.0
    %1618 = vmatprep.subr.mxu0 0.0
    %1619 = vmatpush2.msra.mxu0 0.0
    %1620 = vmatprep.subr.mxu0 0.0
    %1621 = vmatpush2.msra.mxu0 0.0
    %1622 = vmatprep.subr.mxu0 0.0
    %1623 = vmatpush2.msra.mxu0 0.0
    %1624 = vmatprep.subr.mxu0 0.0
    %1625 = vmatpush2.msra.mxu0 0.0
    %1626 = vmatprep.subr.mxu0 0.0
    %1627 = vmatpush2.msra.mxu0 0.0
    %1628 = vmatprep.subr.mxu0 0.0
    %1629 = vmatpush2.msra.mxu0 0.0
    %1630 = vmatprep.subr.mxu0 0.0
    %1631 = vmatpush2.msra.mxu0 0.0
    %1632 = vmatprep.subr.mxu0 0.0
    %1633 = vmatpush2.msra.mxu0 0.0
    %1634 = vmatprep.subr.mxu0 0.0
    %1635 = vmatpush2.msra.mxu0 0.0
    %1636 = vmatprep.subr.mxu0 0.0
    %1637 = vmatpush2.msra.mxu0 0.0
    %1638 = vmatprep.mubr.f32.mxu0 0.0
    %1639 = vmatmul.mubr.f32.gmra.mxu0 %v1572
    %v1640 = vpop.f32.mrf.mxu0
    %v1641 = vadd.f32 0.0, %v1640
    %v1642 = vpop.f32.mrf.mxu0
    %1643 = vdwg.mxu0
    %v1644 = vadd.f32 %v252, %v1641
    %v1645 = vtanh.pop %v1644
    %v1646 = vmul.f32 %v1645, 0.5
    %v1647 = vadd.f32 %v1646, 0.5
    %v1648 = vsel %vm50, %v1645, %v1647
    %v1649 = vmul.f32 %v1648, %v1461
    %1651 = vrot.lane.b32.xlu0 %v1648, 64
    %v1652 = vpop.permute.xlu0 %1651
    %v1654 = vmul.f32 %v1648, %v1652
    %1656 = vrot.lane.b32.xlu0 %v1654, 32
    %v1657 = vpop.permute.xlu0 %1656
    %v1659 = vadd.f32 %v1649, %v1657
    %v1660 = vtanh.pop %v1659
    %1662 = vrot.lane.b32.xlu0 %v1660, 64
    %v1663 = vpop.permute.xlu0 %1662
    %v1665 = vmul.f32 %v1648, %v1663
    %vm1666 = vcmp.gt.s32.totalorder %v45, 7
    %v1667 = vsel %vm1666, 1, 0
    %1668 = vset.pattern.permute.xlu0 0
    %1669 = vperm.xlu0 %1668, %v1667
    %v1670 = vpop.permute.xlu0 %1669
    %vm1671 = vcmp.eq.s32.totalorder %v1670, 1
    %v1672 = vsel %vm1671, %v1665, %v1460
    %v1673 = vsel %vm1671, %v1659, %v1461
    %v1674 = vsel %vm1671, %v1665, 0.0
    %1676 = vrot.lane.b32.xlu0 %v1462, 32
    %v1677 = vpop.permute.xlu0 %1676
    %1680 = vrot.lane.b32.xlu0 %v1566, 64
    %v1681 = vpop.permute.xlu0 %1680
    %v1683 = vsel %vm300, %v1677, %v1681
    %v1685 = vsel %vm412, %v1683, 0
    %1687 = vmatprep.subr.mxu0 0.0
    %1688 = vmatpush1.msra.mxu0 0.0
    %1689 = vmatprep.subr.mxu0 0.0
    %1690 = vmatpush1.msra.mxu0 0.0
    %1691 = vmatprep.subr.mxu0 0.0
    %1692 = vmatpush1.msra.mxu0 0.0
    %1693 = vmatprep.subr.mxu0 0.0
    %1694 = vmatpush1.msra.mxu0 0.0
    %1695 = vmatprep.subr.mxu0 0.0
    %1696 = vmatpush1.msra.mxu0 0.0
    %1697 = vmatprep.subr.mxu0 0.0
    %1698 = vmatpush1.msra.mxu0 0.0
    %1699 = vmatprep.subr.mxu0 0.0
    %1700 = vmatpush1.msra.mxu0 0.0
    %1701 = vmatprep.subr.mxu0 0.0
    %1702 = vmatpush1.msra.mxu0 0.0
    %1703 = vmatprep.subr.mxu0 0.0
    %1704 = vmatpush1.msra.mxu0 %v266
    %1705 = vmatprep.subr.mxu0 0.0
    %1706 = vmatpush1.msra.mxu0 %v265
    %1707 = vmatprep.subr.mxu0 0.0
    %1708 = vmatpush1.msra.mxu0 %v264
    %1709 = vmatprep.subr.mxu0 0.0
    %1710 = vmatpush1.msra.mxu0 %v263
    %1711 = vmatprep.subr.mxu0 0.0
    %1712 = vmatpush1.msra.mxu0 %v262
    %1713 = vmatprep.subr.mxu0 0.0
    %1714 = vmatpush1.msra.mxu0 %v261
    %1715 = vmatprep.subr.mxu0 0.0
    %1716 = vmatpush1.msra.mxu0 %v260
    %1717 = vmatprep.subr.mxu0 0.0
    %1718 = vmatpush1.msra.mxu0 %v259
    %1719 = vmatprep.subr.mxu0 0.0
    %1720 = vmatpush2.msra.mxu0 0.0
    %1721 = vmatprep.subr.mxu0 0.0
    %1722 = vmatpush2.msra.mxu0 0.0
    %1723 = vmatprep.subr.mxu0 0.0
    %1724 = vmatpush2.msra.mxu0 0.0
    %1725 = vmatprep.subr.mxu0 0.0
    %1726 = vmatpush2.msra.mxu0 0.0
    %1727 = vmatprep.subr.mxu0 0.0
    %1728 = vmatpush2.msra.mxu0 0.0
    %1729 = vmatprep.subr.mxu0 0.0
    %1730 = vmatpush2.msra.mxu0 0.0
    %1731 = vmatprep.subr.mxu0 0.0
    %1732 = vmatpush2.msra.mxu0 0.0
    %1733 = vmatprep.subr.mxu0 0.0
    %1734 = vmatpush2.msra.mxu0 0.0
    %1735 = vmatprep.subr.mxu0 0.0
    %1736 = vmatpush2.msra.mxu0 0.0
    %1737 = vmatprep.subr.mxu0 0.0
    %1738 = vmatpush2.msra.mxu0 0.0
    %1739 = vmatprep.subr.mxu0 0.0
    %1740 = vmatpush2.msra.mxu0 0.0
    %1741 = vmatprep.subr.mxu0 0.0
    %1742 = vmatpush2.msra.mxu0 0.0
    %1743 = vmatprep.subr.mxu0 0.0
    %1744 = vmatpush2.msra.mxu0 0.0
    %1745 = vmatprep.subr.mxu0 0.0
    %1746 = vmatpush2.msra.mxu0 0.0
    %1747 = vmatprep.subr.mxu0 0.0
    %1748 = vmatpush2.msra.mxu0 0.0
    %1749 = vmatprep.subr.mxu0 0.0
    %1750 = vmatpush2.msra.mxu0 0.0
    %1751 = vmatprep.mubr.f32.mxu0 0.0
    %1752 = vmatmul.mubr.f32.gmra.mxu0 %v1685
    %v1753 = vpop.f32.mrf.mxu0
    %v1754 = vadd.f32 %v410, %v1753
    %v1755 = vpop.f32.mrf.mxu0
    %1756 = vdwg.mxu0
    %v1757 = vtanh.pop %v1754
    %v1758 = vmul.f32 %v1757, 0.5
    %v1759 = vadd.f32 %v1758, 0.5
    %v1760 = vsel %vm50, %v1757, %v1759
    %v1761 = vmul.f32 %v1760, %v1567
    %1763 = vrot.lane.b32.xlu0 %v1760, 64
    %v1764 = vpop.permute.xlu0 %1763
    %v1766 = vmul.f32 %v1760, %v1764
    %1768 = vrot.lane.b32.xlu0 %v1766, 32
    %v1769 = vpop.permute.xlu0 %1768
    %v1771 = vadd.f32 %v1761, %v1769
    %v1772 = vtanh.pop %v1771
    %1774 = vrot.lane.b32.xlu0 %v1772, 64
    %v1775 = vpop.permute.xlu0 %1774
    %v1777 = vmul.f32 %v1760, %v1775
    %v1778 = vsel %vm1459, %v1777, %v1566
    %v1779 = vsel %vm1459, %v1771, %v1567
    %v1780 = vsel %vm1459, %v1777, 0.0
    %1782 = vrot.lane.b32.xlu0 %v1674, 32
    %v1783 = vpop.permute.xlu0 %1782
    %1786 = vrot.lane.b32.xlu0 %v1778, 64
    %v1787 = vpop.permute.xlu0 %1786
    %v1789 = vsel %vm300, %v1783, %v1787
    %v1791 = vsel %vm412, %v1789, 0
    %1793 = vmatprep.subr.mxu0 0.0
    %1794 = vmatpush1.msra.mxu0 0.0
    %1795 = vmatprep.subr.mxu0 0.0
    %1796 = vmatpush1.msra.mxu0 0.0
    %1797 = vmatprep.subr.mxu0 0.0
    %1798 = vmatpush1.msra.mxu0 0.0
    %1799 = vmatprep.subr.mxu0 0.0
    %1800 = vmatpush1.msra.mxu0 0.0
    %1801 = vmatprep.subr.mxu0 0.0
    %1802 = vmatpush1.msra.mxu0 0.0
    %1803 = vmatprep.subr.mxu0 0.0
    %1804 = vmatpush1.msra.mxu0 0.0
    %1805 = vmatprep.subr.mxu0 0.0
    %1806 = vmatpush1.msra.mxu0 0.0
    %1807 = vmatprep.subr.mxu0 0.0
    %1808 = vmatpush1.msra.mxu0 0.0
    %1809 = vmatprep.subr.mxu0 0.0
    %1810 = vmatpush1.msra.mxu0 %v266
    %1811 = vmatprep.subr.mxu0 0.0
    %1812 = vmatpush1.msra.mxu0 %v265
    %1813 = vmatprep.subr.mxu0 0.0
    %1814 = vmatpush1.msra.mxu0 %v264
    %1815 = vmatprep.subr.mxu0 0.0
    %1816 = vmatpush1.msra.mxu0 %v263
    %1817 = vmatprep.subr.mxu0 0.0
    %1818 = vmatpush1.msra.mxu0 %v262
    %1819 = vmatprep.subr.mxu0 0.0
    %1820 = vmatpush1.msra.mxu0 %v261
    %1821 = vmatprep.subr.mxu0 0.0
    %1822 = vmatpush1.msra.mxu0 %v260
    %1823 = vmatprep.subr.mxu0 0.0
    %1824 = vmatpush1.msra.mxu0 %v259
    %1825 = vmatprep.subr.mxu0 0.0
    %1826 = vmatpush2.msra.mxu0 0.0
    %1827 = vmatprep.subr.mxu0 0.0
    %1828 = vmatpush2.msra.mxu0 0.0
    %1829 = vmatprep.subr.mxu0 0.0
    %1830 = vmatpush2.msra.mxu0 0.0
    %1831 = vmatprep.subr.mxu0 0.0
    %1832 = vmatpush2.msra.mxu0 0.0
    %1833 = vmatprep.subr.mxu0 0.0
    %1834 = vmatpush2.msra.mxu0 0.0
    %1835 = vmatprep.subr.mxu0 0.0
    %1836 = vmatpush2.msra.mxu0 0.0
    %1837 = vmatprep.subr.mxu0 0.0
    %1838 = vmatpush2.msra.mxu0 0.0
    %1839 = vmatprep.subr.mxu0 0.0
    %1840 = vmatpush2.msra.mxu0 0.0
    %1841 = vmatprep.subr.mxu0 0.0
    %1842 = vmatpush2.msra.mxu0 0.0
    %1843 = vmatprep.subr.mxu0 0.0
    %1844 = vmatpush2.msra.mxu0 0.0
    %1845 = vmatprep.subr.mxu0 0.0
    %1846 = vmatpush2.msra.mxu0 0.0
    %1847 = vmatprep.subr.mxu0 0.0
    %1848 = vmatpush2.msra.mxu0 0.0
    %1849 = vmatprep.subr.mxu0 0.0
    %1850 = vmatpush2.msra.mxu0 0.0
    %1851 = vmatprep.subr.mxu0 0.0
    %1852 = vmatpush2.msra.mxu0 0.0
    %1853 = vmatprep.subr.mxu0 0.0
    %1854 = vmatpush2.msra.mxu0 0.0
    %1855 = vmatprep.subr.mxu0 0.0
    %1856 = vmatpush2.msra.mxu0 0.0
    %1857 = vmatprep.mubr.f32.mxu0 0.0
    %1858 = vmatmul.mubr.f32.gmra.mxu0 %v1791
    %v1859 = vpop.f32.mrf.mxu0
    %v1860 = vadd.f32 %v410, %v1859
    %v1861 = vpop.f32.mrf.mxu0
    %1862 = vdwg.mxu0
    %v1863 = vtanh.pop %v1860
    %v1864 = vmul.f32 %v1863, 0.5
    %v1865 = vadd.f32 %v1864, 0.5
    %v1866 = vsel %vm50, %v1863, %v1865
    %v1867 = vmul.f32 %v1866, %v1779
    %1869 = vrot.lane.b32.xlu0 %v1866, 64
    %v1870 = vpop.permute.xlu0 %1869
    %v1872 = vmul.f32 %v1866, %v1870
    %1874 = vrot.lane.b32.xlu0 %v1872, 32
    %v1875 = vpop.permute.xlu0 %1874
    %v1877 = vadd.f32 %v1867, %v1875
    %v1878 = vtanh.pop %v1877
    %1880 = vrot.lane.b32.xlu0 %v1878, 64
    %v1881 = vpop.permute.xlu0 %1880
    %v1883 = vmul.f32 %v1866, %v1881
    %v1884 = vsel %vm1671, %v1883, %v1778
    %v1885 = vsel %vm1671, %v1877, %v1779
    %v1886 = vsel %vm1671, %v1883, 0.0
    %1887 = vrot.lane.b32.xlu0 %v507, 32
    %v1888 = vpop.permute.xlu0 %1887
    %1891 = vrot.lane.b32.xlu0 %v720, 64
    %v1892 = vpop.permute.xlu0 %1891
    %1895 = vrot.lane.b32.xlu0 %v932, 96
    %v1896 = vpop.permute.xlu0 %1895
    %1899 = vrot.lane.b32.xlu0 %v1356, 32
    %v1900 = vpop.permute.xlu0 %1899
    %1903 = vrot.lane.b32.xlu0 %v1568, 64
    %v1904 = vpop.permute.xlu0 %1903
    %1907 = vrot.lane.b32.xlu0 %v1780, 96
    %v1908 = vpop.permute.xlu0 %1907
    %v1910 = vsel %vm300, %v1888, %v1892
    %v1911 = vsel %vm412, %v1910, %v1896
    %vm1912 = vcmask 785408
    %v1913 = vsel %vm1912, %v1911, %v1144
    %v1914 = vsel %vm300, %v1900, %v1904
    %v1915 = vsel %vm412, %v1914, %v1908
    %v1916 = vsel %vm1912, %v1915, %v1886
    %1917 = vst [vmem:[%s7] sm:$0xff] %v1913
    %1918 = vst [vmem:[%s7 + $0x8] sm:$0xff] %v1916
    %1920 = vrot.lane.b32.xlu0 %v1672, 32
    %v1921 = vpop.permute.xlu0 %1920
    %1923 = vst.msk [vmem:[#allocation5] sm:$0xff] %vm300, %v1921
    %1925 = vrot.lane.b32.xlu0 %v1673, 96
    %v1926 = vpop.permute.xlu0 %1925
    %1928 = vst.msk [vmem:[#allocation6] sm:$0xff] %vm300, %v1926
    %1930 = vrot.lane.b32.xlu0 %v1884, 32
    %v1931 = vpop.permute.xlu0 %1930
    %s1933 = scalar_lea.vmem [#allocation5], 8
    %1934 = vst.msk [vmem:[%s1933] sm:$0xff] %vm300, %v1931
    %1936 = vrot.lane.b32.xlu0 %v1885, 96
    %v1937 = vpop.permute.xlu0 %1936
    %s1939 = scalar_lea.vmem [#allocation6], 8
    %1940 = vst.msk [vmem:[%s1939] sm:$0xff] %vm300, %v1937
    // Predicated region
    $region34: #{encoder_forward.1} parent=1 // pred_check
      _
    $region35: #{encoder_forward.1} parent=1 // pred_check_branch
      %1942 = sbr.rel (0) target = $region37
    $region36: #{encoder_forward.1} parent=1 // pred_region
      _
    $region37: #{encoder_forward.1} parent=1 // pred_fallthru
      _
    // Predicated region
    $region38: #{encoder_forward.1} parent=1 // pred_check
      _
    $region39: #{encoder_forward.1} parent=1 // pred_check_branch
      %1944 = sbr.rel (0) target = $region41
    $region40: #{encoder_forward.1} parent=1 // pred_region
      %s1946 = ssub.s32 256, 256
      %1947 = vsyncadd [#allocation4], %s1946
      %s1948 = sshll.u32 [#allocation5], 4
      %s1949 = int_to_ptr.vmem [resolvable:$true] %s1948
      %1954 = dma.vmem_to_hbm [thread:$0]  %s1949, 256, %s8, [#allocation4], 128, 128, 8
    $region41: #{encoder_forward.1} parent=1 // pred_fallthru
      _
    // Predicated region
    $region42: #{encoder_forward.1} parent=1 // pred_check
      _
    $region43: #{encoder_forward.1} parent=1 // pred_check_branch
      %1956 = sbr.rel (0) target = $region45
    $region44: #{encoder_forward.1} parent=1 // pred_region
      %s1958 = ssub.s32 256, 256
      %1959 = vsyncadd [#allocation7], %s1958
      %s1960 = sshll.u32 [#allocation6], 4
      %s1961 = int_to_ptr.vmem [resolvable:$true] %s1960
      %1966 = dma.vmem_to_hbm [thread:$0]  %s1961, 256, %s9, [#allocation7], 128, 128, 8
    $region45: #{encoder_forward.1} parent=1 // pred_fallthru
      _
    // Predicated region
    $region46: #{encoder_forward.1} parent=1 // pred_check
      _
    $region47: #{encoder_forward.1} parent=1 // pred_check_branch
      %1968 = sbr.rel (0) target = $region49
    $region48: #{encoder_forward.1} parent=1 // pred_region
      _
    $region49: #{encoder_forward.1} parent=1 // pred_fallthru
      _
    // Predicated region
    $region50: #{encoder_forward.1} parent=1 // pred_check
      _
    $region51: #{encoder_forward.1} parent=1 // pred_check_branch
      %1970 = sbr.rel (0) target = $region53
    $region52: #{encoder_forward.1} parent=1 // pred_region
      %1971 = dma.done [#allocation4], 256
    $region53: #{encoder_forward.1} parent=1 // pred_fallthru
      _
    // Predicated region
    $region54: #{encoder_forward.1} parent=1 // pred_check
      _
    $region55: #{encoder_forward.1} parent=1 // pred_check_branch
      %1973 = sbr.rel (0) target = $region57
    $region56: #{encoder_forward.1} parent=1 // pred_region
      %1974 = dma.done [#allocation7], 256
    $region57: #{encoder_forward.1} parent=1 // pred_fallthru
      _
    %1975 = vsyncpa [#allocation3], 1
    %1976 = vsyncpa [#allocation4], 1
    %1977 = vsyncpa [#allocation7], 1

</llo_original>
